<compile_context>
chip_gen: v7x
topology: tpu7x:2x2x1
jax: 0.10.0
libtpu: 0.0.40
codegen_flags: <defaults>
</compile_context>

<pallas_src>
import functools

import jax
import jax.numpy as jnp
from jax.experimental import pallas as pl
from jax.experimental.pallas import tpu as pltpu


# ----------------------------------------------------------------------------- 
# Kernel
# -----------------------------------------------------------------------------
def _soft_group_attention_kernel(
    x_ref, wf_ref, bf_ref, wp_ref, bp_ref, o_ref,
    *, dim, n, block_b, pad, keep_ratio, topk_iters=30,
):
    bb = block_b
    P = pad  # lane-aligned slab width per projection (>= max(dim, gp_num))

    # ---- fused q|k|v|gl projection over all bb*n tokens (one bf16 MXU pass) ----
    # (scale and 1/t are already folded into the weights/bias in the wrapper)
    x = x_ref[...].reshape(bb * n, dim)                       # bf16 (M, dim)
    qkvg = jnp.dot(x, wf_ref[...], preferred_element_type=jnp.float32)
    qkvg = qkvg + bf_ref[...]                                 # f32 bias (1, 4P)

    # Tile-aligned 128-lane slabs.  Zero-padded columns make the math exact.
    q = qkvg[:, 0 * P:1 * P]
    k = qkvg[:, 1 * P:2 * P]
    v = qkvg[:, 2 * P:3 * P]

    # ---- scaled-dot-product softmax attention (batched over bb) ----
    qb = q.astype(jnp.bfloat16).reshape(bb, n, P)
    kb = k.astype(jnp.bfloat16).reshape(bb, n, P)
    s = jnp.einsum("bnd,bmd->bnm", qb, kb,
                   preferred_element_type=jnp.float32)        # (bb, n, n) f32
    s = s - jnp.max(s, axis=-1, keepdims=True)
    p = jnp.exp(s)
    attn = p * pl.reciprocal(jnp.sum(p, axis=-1, keepdims=True), approx=True)

    # ---- soft-group top-k mask ----
    if keep_ratio >= 1.0:
        # k == n  ->  torch.topk keeps every entry  ->  mask of ones; the whole
        # group branch cannot change the output, so it is skipped.
        aw = attn
    else:
        # Group softmax.  gl already contains the fused gp projection and the
        # 1/t scaling; its padded columns carry a -1e30 bias -> probability 0.
        gl = qkvg[:, 3 * P:4 * P]
        gl = gl - jnp.max(gl, axis=-1, keepdims=True)
        ge = jnp.exp(gl)
        # Exact divide (not EUP approx): this feeds a discrete top-k decision.
        gw = ge / jnp.sum(ge, axis=-1, keepdims=True)
        gw3 = gw.astype(jnp.bfloat16).reshape(bb, n, P)
        gmat = jnp.einsum("bnk,bmk->bnm", gw3, gw3,
                          preferred_element_type=jnp.float32)  # (bb, n, n) in [0,1]

        # keep_top_values: keep entry (i, j) iff gmat[i, j] >= k-th largest of
        # row i.  The k-th largest is located by value bisection on [0, 2):
        # O(n^2 * topk_iters) compares and O(bb*n^2) VMEM (the old rank count
        # was O(n^3) in both).  Invariants:  count(>= lo) >= kk,  count(>= hi) < kk.
        # TODO(synk): boundary ties are all kept (same as a strict-> rank rule),
        # which differs from torch.topk's index-ordered tie-breaking.
        kk = float(max(int(n * keep_ratio), 1))

        def bisect(_, carry):
            lo, hi = carry
            mid = 0.5 * (lo + hi)
            cnt = jnp.sum((gmat >= mid).astype(jnp.float32), axis=-1,
                          keepdims=True)
            take = cnt >= kk
            return jnp.where(take, mid, lo), jnp.where(take, hi, mid)

        lo0 = jnp.zeros((bb, n, 1), jnp.float32)
        hi0 = jnp.full((bb, n, 1), 2.0, jnp.float32)
        lo, _ = jax.lax.fori_loop(0, topk_iters, bisect, (lo0, hi0))
        aw = jnp.where(gmat >= lo, attn, 0.0)

    # Re-normalize.  Masked rows are never all-zero (the row max always
    # survives the threshold), so the approx reciprocal is harmless.
    aw = aw * pl.reciprocal(jnp.sum(aw, axis=-1, keepdims=True) + 1e-8,
                            approx=True)
    # nn.Dropout is identity here (eval / p == 0.0).

    # ---- value aggregation + padded output projection (bf16 MXU, f32 acc) ----
    vb = v.astype(jnp.bfloat16).reshape(bb, n, P)
    av = jnp.einsum("bnm,bmd->bnd", aw.astype(jnp.bfloat16), vb,
                    preferred_element_type=jnp.float32)        # (bb, n, P)
    out = jnp.dot(av.reshape(bb * n, P).astype(jnp.bfloat16), wp_ref[...],
                  preferred_element_type=jnp.float32) + bp_ref[...]

    # Full 128-lane-dense unmasked store; the wrapper slices the first `dim`
    # columns (the padded projection columns are exact zeros anyway).
    o_ref[...] = out.astype(o_ref.dtype)


# -----------------------------------------------------------------------------
# Wrapper-side parameter fusion (exact linear algebra, done once per call)
# -----------------------------------------------------------------------------
def _fuse_params(params, *, dim, gp_num, t, scale, pad):
    """Fold scale, 1/t and the gp projection into one padded, slab-aligned
    weight.  Column layout: [ q*scale | k | v | (W_g @ W_gp)/t ], each slab
    zero-padded to `pad` lanes; the gl pad columns get a -1e30 bias."""
    wqkvg, bqkvg, wgp, wproj, bproj = params
    f32 = jnp.float32
    wqkvg = wqkvg.astype(f32)
    bqkvg = bqkvg.astype(f32)
    wgp = wgp.astype(f32)
    wproj = wproj.astype(f32)
    bproj = bproj.astype(f32)

    wq, wk, wv, wg = (wqkvg[:, i * dim:(i + 1) * dim] for i in range(4))
    bq, bk, bv, bg = (bqkvg[:, i * dim:(i + 1) * dim] for i in range(4))

    wgl = (wg @ wgp) / t                     # (dim, gp_num)  -- exact fold
    bgl = (bg @ wgp) / t                     # (1, gp_num)

    def padc(a, width):
        return jnp.pad(a, ((0, 0), (0, width - a.shape[-1])))

    w_fused = jnp.concatenate(
        [padc(wq * scale, pad), padc(wk, pad), padc(wv, pad), padc(wgl, pad)],
        axis=-1)
    # gl pads: -1e30 bias (applied AFTER the 1/t fold) -> softmax prob exactly 0.
    bgl_pad = jnp.concatenate(
        [bgl, jnp.full((1, pad - gp_num), -1e30, f32)], axis=-1)
    b_fused = jnp.concatenate(
        [padc(bq * scale, pad), padc(bk, pad), padc(bv, pad), bgl_pad], axis=-1)

    # Output projection padded to a full (pad, pad) slab on both sides so the
    # kernel's final store is 128-lane dense (extra rows/cols are zero -> exact).
    w_proj_pad = jnp.zeros((pad, pad), f32).at[:dim, :dim].set(wproj)
    b_proj_pad = padc(bproj, pad)

    return (w_fused.astype(jnp.bfloat16), b_fused,
            w_proj_pad.astype(jnp.bfloat16), b_proj_pad)


def _num_tensorcores_per_chip():
    """v5e/v6e expose a single TensorCore per device; v7x (and the megacore
    training chips) expose two.  Unknown -> assume 2 (never idle a core)."""
    try:
        kind = jax.devices()[0].device_kind.lower()
    except Exception:
        return 2
    if any(tag in kind for tag in
           ("v5e", "v5 lite", "v5lite", "v6e", "v6 lite", "v6lite")):
        return 1
    return 2


def _vmem_budget_bytes():
    cap = 64 * 1024 * 1024
    try:
        cap = int(getattr(pltpu.get_tpu_info(), "vmem_capacity_bytes", cap))
    except Exception:
        pass
    return int(cap * 0.75)          # leave headroom for compiler scratch


# -----------------------------------------------------------------------------
# Public entry point
# -----------------------------------------------------------------------------
def soft_group_attention(x, params, *, gp_num=49, t=1.0, keep_ratio=1.0,
                         block_b=None):
    """SoftGroupAttention forward.

    x: (b, n, dim).  params = (wqkvg (dim, 4*dim), bqkvg (1, 4*dim),
    wgp (dim, gp_num), wproj (dim, dim), bproj (1, dim))  -- nn.Linear weights
    transposed to (in, out) so the kernel computes x @ W.
    """
    assert t > 0, "Temperature must be positive"
    b, n, dim = x.shape
    out_dtype = x.dtype
    scale = dim ** (-0.5)
    pad = 128 * pl.cdiv(max(dim, gp_num), 128)      # per-projection slab width

    w_fused, b_fused, w_proj_pad, b_proj_pad = _fuse_params(
        params, dim=dim, gp_num=gp_num, t=float(t), scale=scale, pad=pad)
    # TODO(synk): x stays in its natural (bb, n, dim) block; presenting it as a
    # lane-dense (b, n*dim) slab would need a minor-dim reshape inside the
    # kernel -- only worth it once n*dim input DMA dominates.
    x_in = x.astype(jnp.bfloat16)

    # ---- generation-aware batch blocking ----
    n_tc = _num_tensorcores_per_chip()
    if block_b is None:
        # 1 TC (v5e/v6e): one grid step -> no per-step overhead, M = b*n fill.
        # 2 TCs (v7x): >= 2 steps per core so each core can double-buffer DMAs.
        block_b = b if n_tc <= 1 else max(1, b // (2 * n_tc))
    block_b = max(1, min(block_b, b))

    # ---- VMEM high-water estimate per grid step (includes the n*n temps) ----
    vmem_budget = _vmem_budget_bytes()

    def step_bytes(bb):
        io = 2 * bb * n * dim * 2 + 2 * bb * n * pad * 4   # dbl-buffered x / out
        proj = bb * n * (4 * pad) * (4 + 2)                # qkvg f32 + bf16 slabs
        nn_mats = (6 if keep_ratio < 1.0 else 4) * bb * n * n * 4
        weights = 2 * (dim * 4 * pad * 2 + pad * pad * 2 + 5 * pad * 4)
        return io + proj + nn_mats + weights

    while block_b > 1 and step_bytes(block_b) > vmem_budget:
        block_b -= 1
    while b % block_b:                                     # must divide the batch
        block_b -= 1
    grid = (b // block_b,)

    kernel = functools.partial(
        _soft_group_attention_kernel,
        dim=dim, n=n, block_b=block_b, pad=pad, keep_ratio=float(keep_ratio))

    out_padded = pl.pallas_call(
        kernel,
        out_shape=jax.ShapeDtypeStruct((b * n, pad), out_dtype),
        grid_spec=pltpu.PrefetchScalarGridSpec(
            num_scalar_prefetch=0,
            grid=grid,
            in_specs=[
                pl.BlockSpec((block_b, n, dim), lambda i: (i, 0, 0)),  # x (bf16)
                pl.BlockSpec((dim, 4 * pad), lambda i: (0, 0)),        # fused W (bf16)
                pl.BlockSpec((1, 4 * pad), lambda i: (0, 0)),          # fused bias (f32)
                pl.BlockSpec((pad, pad), lambda i: (0, 0)),            # W_proj padded (bf16)
                pl.BlockSpec((1, pad), lambda i: (0, 0)),              # b_proj padded (f32)
            ],
            out_specs=pl.BlockSpec((block_b * n, pad), lambda i: (i, 0)),
        ),
        compiler_params=pltpu.CompilerParams(
            dimension_semantics=("parallel",),   # shards grid steps across TCs
            vmem_limit_bytes=vmem_budget,
        ),
    )(x_in, w_fused, b_fused, w_proj_pad, b_proj_pad)

    # Lane-dense (b*n, pad) kernel output -> (b, n, dim); pad columns are zeros.
    return out_padded[:, :dim].reshape(b, n, dim)


# -----------------------------------------------------------------------------
# Pure-JAX reference (mirrors the PyTorch forward) for validation
# -----------------------------------------------------------------------------
def _reference(x, params, *, gp_num, t=1.0, keep_ratio=1.0,
               match_kernel_group_numerics=False):
    """f32 reference.  With match_kernel_group_numerics=True the *discrete*
    top-k mask is computed from the same bf16 fused operands the kernel uses
    (so rare near-tie membership flips don't dominate the comparison); all
    continuous math stays f32."""
    wqkvg, bqkvg, wgp, wproj, bproj = params
    b, n, dim = x.shape
    scale = dim ** (-0.5)
    qkvg = x @ wqkvg + bqkvg[0]
    q, k, v, g = jnp.split(qkvg, 4, axis=-1)
    attn = jax.nn.softmax(jnp.einsum("bnd,bmd->bnm", q, k) * scale, axis=-1)

    if keep_ratio >= 1.0:
        mask = jnp.ones((b, n, n), jnp.float32)
    else:
        if match_kernel_group_numerics:
            pad = 128 * pl.cdiv(max(dim, gp_num), 128)
            wf, bf, _, _ = _fuse_params(params, dim=dim, gp_num=gp_num,
                                        t=float(t), scale=scale, pad=pad)
            gl = jnp.dot(x.astype(jnp.bfloat16), wf[:, 3 * pad:4 * pad],
                         preferred_element_type=jnp.float32) + bf[:, 3 * pad:]
            gw = jax.nn.softmax(gl, axis=-1)            # padded cols -> 0
            gw = gw.astype(jnp.bfloat16).astype(jnp.float32)
            gmat = jnp.einsum("bnk,bmk->bnm", gw, gw)
        else:
            gw = jax.nn.softmax((g @ wgp) / t, axis=-1)
            gmat = jnp.einsum("bnk,bmk->bnm", gw, gw)
        kk = max(int(n * keep_ratio), 1)
        kth = jnp.sort(gmat, axis=-1)[..., n - kk][..., None]
        mask = (gmat >= kth).astype(jnp.float32)        # keep all boundary ties

    aw = attn * mask
    aw = aw / (jnp.sum(aw, axis=-1, keepdims=True) + 1e-8)
    out = jnp.einsum("bnm,bmd->bnd", aw, v)
    return out @ wproj + bproj[0]


if __name__ == "__main__":
    # Small shapes consistent with the module.  B=16 so the batched grid has
    # extent >= 4 on 2-TensorCore chips (block_b=4) and 1 on 1-TC chips.
    B, N, DIM, GP_NUM = 16, 64, 32, 49
    T = 1.0

    key = jax.random.PRNGKey(0)
    kx, k1, k2, k3, k4, k5 = jax.random.split(key, 6)

    x = jax.random.normal(kx, (B, N, DIM), dtype=jnp.float32)

    # Deterministic parameter init (nn.Linear weights transposed to (in, out)).
    # wgp gets a larger scale so the group logits are well separated and the
    # discrete top-k mask is a meaningful (non-degenerate) test.
    params = (
        jax.random.normal(k1, (DIM, 4 * DIM), dtype=jnp.float32) * 0.05,  # qkvg W
        jax.random.normal(k2, (1, 4 * DIM), dtype=jnp.float32) * 0.05,    # qkvg b
        jax.random.normal(k3, (DIM, GP_NUM), dtype=jnp.float32) * 0.50,   # gp W
        jax.random.normal(k4, (DIM, DIM), dtype=jnp.float32) * 0.05,      # proj W
        jax.random.normal(k5, (1, DIM), dtype=jnp.float32) * 0.05,        # proj b
    )

    # --- keep_ratio = 1.0 (module default): strict check vs pure-f32 reference
    out1 = jax.block_until_ready(
        soft_group_attention(x, params, gp_num=GP_NUM, t=T, keep_ratio=1.0))
    ref1 = _reference(x, params, gp_num=GP_NUM, t=T, keep_ratio=1.0)
    assert out1.shape == (B, N, DIM)
    err1 = float(jnp.max(jnp.abs(out1 - ref1)))
    assert jnp.allclose(out1, ref1, atol=2e-2, rtol=2e-2), (
        f"keep_ratio=1.0 mismatch vs reference (max abs err {err1:.3e})")

    # --- keep_ratio = 0.25: exercises the soft-group top-k path (per review).
    KEEP = 0.25
    out2 = jax.block_until_ready(
        soft_group_attention(x, params, gp_num=GP_NUM, t=T, keep_ratio=KEEP))
    ref2 = _reference(x, params, gp_num=GP_NUM, t=T, keep_ratio=KEEP,
                      match_kernel_group_numerics=True)
    assert out2.shape == (B, N, DIM)
    bad = jnp.abs(out2 - ref2) > 3e-2
    frac_bad = float(jnp.mean(bad.astype(jnp.float32)))
    # The top-k mask is discrete: the rare query row whose k-th/(k+1)-th group
    # scores tie to within a few f32 ULPs may legitimately flip membership, so
    # require the overwhelming majority of elements to agree.
    assert frac_bad < 0.02, (
        f"keep_ratio<1 mismatch: {frac_bad:.4f} of output elements off")

    print("KERNEL_OK")
</pallas_src>

<mosaic_0001>
module attributes {stable_mosaic.version = 11 : i64} {
  func.func @_soft_group_attention_kernel(%arg0: i32, %arg1: memref<4x64x32xbf16, #tpu.memory_space<vmem>>, %arg2: memref<32x512xbf16, #tpu.memory_space<vmem>>, %arg3: memref<1x512xf32, #tpu.memory_space<vmem>>, %arg4: memref<128x128xbf16, #tpu.memory_space<vmem>>, %arg5: memref<1x128xf32, #tpu.memory_space<vmem>>, %arg6: memref<256x128xf32, #tpu.memory_space<vmem>>) attributes {dimension_semantics = [#tpu.dimension_semantics<parallel>], iteration_bounds = array<i64: 4>, scalar_prefetch = 0 : i64, scratch_operands = 0 : i64, tpu.core_type = #tpu.core_type<tc>, window_params = [{transform_indices = @transform_0, window_bounds = array<i64: 4, 64, 32>}, {pipeline_mode = #tpu.pipeline_mode<synchronous>, transform_indices = @transform_1, window_bounds = array<i64: 32, 512>}, {pipeline_mode = #tpu.pipeline_mode<synchronous>, transform_indices = @transform_2, window_bounds = array<i64: 1, 512>}, {pipeline_mode = #tpu.pipeline_mode<synchronous>, transform_indices = @transform_3, window_bounds = array<i64: 128, 128>}, {pipeline_mode = #tpu.pipeline_mode<synchronous>, transform_indices = @transform_4, window_bounds = array<i64: 1, 128>}, {transform_indices = @transform_5, window_bounds = array<i64: 256, 128>}]} {
    %c0 = arith.constant 0 : index
    %c0_0 = arith.constant 0 : index
    %c0_1 = arith.constant 0 : index
    %0 = vector.load %arg1[%c0, %c0_0, %c0_1] : memref<4x64x32xbf16, #tpu.memory_space<vmem>>, vector<4x64x32xbf16>
    %1 = vector.shape_cast %0 : vector<4x64x32xbf16> to vector<256x32xbf16>
    %c0_2 = arith.constant 0 : index
    %c0_3 = arith.constant 0 : index
    %2 = vector.load %arg2[%c0_2, %c0_3] : memref<32x512xbf16, #tpu.memory_space<vmem>>, vector<32x512xbf16>
    %cst = arith.constant dense<0.000000e+00> : vector<256x512xf32>
    %3 = tpu.matmul %1, %2, %cst {dimension_numbers = #tpu.dot_dimension_numbers<[1], [0], [0], [1], [0, 0, 1, 1], [], []>} : vector<256x32xbf16>, vector<32x512xbf16>, vector<256x512xf32> -> vector<256x512xf32>
    %c0_4 = arith.constant 0 : index
    %c0_5 = arith.constant 0 : index
    %4 = vector.load %arg3[%c0_4, %c0_5] : memref<1x512xf32, #tpu.memory_space<vmem>>, vector<1x512xf32>
    %5 = vector.broadcast %4 : vector<1x512xf32> to vector<256x512xf32>
    %6 = arith.addf %3, %5 : vector<256x512xf32>
    %7 = vector.extract_strided_slice %6 {offsets = [0, 0], sizes = [256, 128], strides = [1, 1]} : vector<256x512xf32> to vector<256x128xf32>
    %8 = vector.extract_strided_slice %6 {offsets = [0, 128], sizes = [256, 128], strides = [1, 1]} : vector<256x512xf32> to vector<256x128xf32>
    %9 = vector.extract_strided_slice %6 {offsets = [0, 256], sizes = [256, 128], strides = [1, 1]} : vector<256x512xf32> to vector<256x128xf32>
    %10 = arith.truncf %7 : vector<256x128xf32> to vector<256x128xbf16>
    %11 = vector.shape_cast %10 : vector<256x128xbf16> to vector<4x64x128xbf16>
    %12 = arith.truncf %8 : vector<256x128xf32> to vector<256x128xbf16>
    %13 = vector.shape_cast %12 : vector<256x128xbf16> to vector<4x64x128xbf16>
    "tpu.trace_start"() <{level = 10 : i32, message = "bnd,bmd->bnm"}> : () -> ()
    %cst_6 = arith.constant dense<0.000000e+00> : vector<4x64x64xf32>
    %14 = tpu.matmul %11, %13, %cst_6 {dimension_numbers = #tpu.dot_dimension_numbers<[2], [2], [1], [1], [0, 0, 0, 1, 1, 1], [0], [0]>} : vector<4x64x128xbf16>, vector<4x64x128xbf16>, vector<4x64x64xf32> -> vector<4x64x64xf32>
    "tpu.trace_stop"() : () -> ()
    %cst_7 = arith.constant dense<0xFF800000> : vector<4x64xf32>
    %15 = vector.multi_reduction <maximumf>, %14, %cst_7 [2] : vector<4x64x64xf32> to vector<4x64xf32>
    %16 = vector.shape_cast %15 : vector<4x64xf32> to vector<4x64x1xf32>
    %17 = vector.broadcast %16 : vector<4x64x1xf32> to vector<4x64x64xf32>
    %18 = arith.subf %14, %17 : vector<4x64x64xf32>
    %19 = math.exp %18 : vector<4x64x64xf32>
    %cst_8 = arith.constant dense<0.000000e+00> : vector<4x64xf32>
    %20 = vector.multi_reduction <add>, %19, %cst_8 [2] : vector<4x64x64xf32> to vector<4x64xf32>
    %21 = vector.shape_cast %20 : vector<4x64xf32> to vector<4x64x1xf32>
    %22 = tpu.reciprocal %21 {approx = true} : vector<4x64x1xf32> -> vector<4x64x1xf32>
    %23 = vector.broadcast %22 : vector<4x64x1xf32> to vector<4x64x64xf32>
    %24 = arith.mulf %19, %23 : vector<4x64x64xf32>
    %cst_9 = arith.constant dense<0.000000e+00> : vector<4x64xf32>
    %25 = vector.multi_reduction <add>, %24, %cst_9 [2] : vector<4x64x64xf32> to vector<4x64xf32>
    %26 = vector.shape_cast %25 : vector<4x64xf32> to vector<4x64x1xf32>
    %cst_10 = arith.constant 9.99999993E-9 : f32
    %27 = vector.broadcast %cst_10 : f32 to vector<4x64x1xf32>
    %28 = arith.addf %26, %27 : vector<4x64x1xf32>
    %29 = tpu.reciprocal %28 {approx = true} : vector<4x64x1xf32> -> vector<4x64x1xf32>
    %30 = vector.broadcast %29 : vector<4x64x1xf32> to vector<4x64x64xf32>
    %31 = arith.mulf %24, %30 : vector<4x64x64xf32>
    %32 = arith.truncf %9 : vector<256x128xf32> to vector<256x128xbf16>
    %33 = vector.shape_cast %32 : vector<256x128xbf16> to vector<4x64x128xbf16>
    %34 = arith.truncf %31 : vector<4x64x64xf32> to vector<4x64x64xbf16>
    "tpu.trace_start"() <{level = 10 : i32, message = "bnm,bmd->bnd"}> : () -> ()
    %cst_11 = arith.constant dense<0.000000e+00> : vector<4x64x128xf32>
    %35 = tpu.matmul %34, %33, %cst_11 {dimension_numbers = #tpu.dot_dimension_numbers<[2], [1], [1], [2], [0, 0, 0, 1, 1, 2], [0], [0]>} : vector<4x64x64xbf16>, vector<4x64x128xbf16>, vector<4x64x128xf32> -> vector<4x64x128xf32>
    "tpu.trace_stop"() : () -> ()
    %36 = vector.shape_cast %35 : vector<4x64x128xf32> to vector<256x128xf32>
    %37 = arith.truncf %36 : vector<256x128xf32> to vector<256x128xbf16>
    %c0_12 = arith.constant 0 : index
    %c0_13 = arith.constant 0 : index
    %38 = vector.load %arg4[%c0_12, %c0_13] : memref<128x128xbf16, #tpu.memory_space<vmem>>, vector<128x128xbf16>
    %cst_14 = arith.constant dense<0.000000e+00> : vector<256x128xf32>
    %39 = tpu.matmul %37, %38, %cst_14 {dimension_numbers = #tpu.dot_dimension_numbers<[1], [0], [0], [1], [0, 0, 1, 1], [], []>} : vector<256x128xbf16>, vector<128x128xbf16>, vector<256x128xf32> -> vector<256x128xf32>
    %c0_15 = arith.constant 0 : index
    %c0_16 = arith.constant 0 : index
    %40 = vector.load %arg5[%c0_15, %c0_16] : memref<1x128xf32, #tpu.memory_space<vmem>>, vector<1x128xf32>
    %41 = vector.broadcast %40 : vector<1x128xf32> to vector<256x128xf32>
    %42 = arith.addf %39, %41 : vector<256x128xf32>
    %c0_17 = arith.constant 0 : index
    %c0_18 = arith.constant 0 : index
    %43 = vector.load %arg6[%c0_17, %c0_18] : memref<256x128xf32, #tpu.memory_space<vmem>>, vector<256x128xf32>
    tpu.vector_store %arg6[%c0_17, %c0_18], %42 {strides = array<i32>} : memref<256x128xf32, #tpu.memory_space<vmem>>, vector<256x128xf32>,
    return
  }
  func.func @transform_0(%arg0: i32) -> (i32, i32, i32) {
    %c0_i32 = arith.constant 0 : i32
    %c0_i32_0 = arith.constant 0 : i32
    %c0_i32_1 = arith.constant 0 : i32
    return %arg0, %c0_i32, %c0_i32_0 : i32, i32, i32
  }
  func.func @transform_1(%arg0: i32) -> (i32, i32) {
    %c0_i32 = arith.constant 0 : i32
    %c0_i32_0 = arith.constant 0 : i32
    %c0_i32_1 = arith.constant 0 : i32
    return %c0_i32, %c0_i32_0 : i32, i32
  }
  func.func @transform_2(%arg0: i32) -> (i32, i32) {
    %c0_i32 = arith.constant 0 : i32
    %c0_i32_0 = arith.constant 0 : i32
    %c0_i32_1 = arith.constant 0 : i32
    return %c0_i32, %c0_i32_0 : i32, i32
  }
  func.func @transform_3(%arg0: i32) -> (i32, i32) {
    %c0_i32 = arith.constant 0 : i32
    %c0_i32_0 = arith.constant 0 : i32
    %c0_i32_1 = arith.constant 0 : i32
    return %c0_i32, %c0_i32_0 : i32, i32
  }
  func.func @transform_4(%arg0: i32) -> (i32, i32) {
    %c0_i32 = arith.constant 0 : i32
    %c0_i32_0 = arith.constant 0 : i32
    %c0_i32_1 = arith.constant 0 : i32
    return %c0_i32, %c0_i32_0 : i32, i32
  }
  func.func @transform_5(%arg0: i32) -> (i32, i32) {
    %c0_i32 = arith.constant 0 : i32
    %c0_i32_0 = arith.constant 0 : i32
    return %arg0, %c0_i32 : i32, i32
  }
}

</mosaic_0001>

<llo_original>
// kernel: tpu_custom_call.1
$region0: #{tpu_custom_call.1}
  #allocation0 [shape = 'u32[]', space=smem, size = 0x4, offset = 0x4, fixed_abs, tag = 'smem constant byte address 0x4 - core index']
  #allocation1 [shape = 'u32[144,128]{1,0:T(1,128)}', space=vmem, size = 0x12000, scoped, tag = 'internal scratch']
  %s0 = inlined_call_operand.vmem [shape: bf16[16,64,32], index: 0, kind: input, shape index: {}]
  %s1 = inlined_call_operand.vmem [shape: bf16[32,512], index: 1, kind: input, shape index: {}]
  %s2 = inlined_call_operand.vmem [shape: f32[1,512], index: 2, kind: input, shape index: {}]
  %s3 = inlined_call_operand.vmem [shape: bf16[128,128], index: 3, kind: input, shape index: {}]
  %s4 = inlined_call_operand.vmem [shape: f32[1,128], index: 4, kind: input, shape index: {}]
  %s5 = inlined_call_operand.hbm [shape: f32[1024,128], index: 5, kind: output, shape index: {}]
  %s6 = sld [smem:[#allocation0]]
  $region53: #{tpu_custom_call.1} parent=0
    _
  %s8 = ssub.s32 1, %s6
  %s9 = scalar_select 0, %s8, %s6
  $region1: #{tpu_custom_call.1} parent=0
    #allocation2 [shape = 'u8[262144]{0}', space=vmem, size = 0x40000, scoped, tag = 'output window, operand 0']
    #allocation3 [shape = 's32[2]{0}', space=sflag, size = 0x8, scoped, tag = 'scoped memory for tpu_custom_call.1']
    %10 = vsyncpa [#allocation3], 0
    %s11 = scalar_lea.sflag [#allocation3], 1
    %12 = vsyncpa %s11, 0
    loop: start=0, step=1, limit=6
    $region2: #{tpu_custom_call.1} parent=1 // loop_pre_header
      _
    $region3: #{tpu_custom_call.1} parent=1 // loop_header
      %s14 = sphi 0, %s18
      %p15 = scmp.ge.s32.totalorder %s14, 6
      %s24 = sphi 0, %s26
      %s27 = sphi 0, %s24
      %s28 = sphi 0, %s27
      %s44 = sphi 0, %s28
      %s48 = sphi 0, %s48
      %s50 = sphi 0, %s48
      %s51 = sphi 0, %s50
      %s65 = sphi 0, %s51
      %s69 = sphi 0, %s69
      %s71 = sphi 0, %s69
      %s72 = sphi 0, %s71
      %s86 = sphi 0, %s72
      %s90 = sphi 0, %s90
      %s92 = sphi 0, %s90
      %s93 = sphi 0, %s92
      %s107 = sphi 0, %s93
      %s111 = sphi 0, %s111
      %s113 = sphi 0, %s111
      %s114 = sphi 0, %s113
      %s128 = sphi 0, %s114
      %s134 = sphi 0, %s136
      %s137 = sphi 0, %s134
      %s138 = sphi 0, %s137
      %s154 = sphi 0, %s138
    $region4: #{tpu_custom_call.1} parent=1 // loop_header_branch
      %17 = sbr.rel (%p15) target = $region8
    $region5: #{tpu_custom_call.1} parent=1 // loop_body
      %s19 = ssub.s32 %s14, 1
      %s20 = ssub.s32 %s14, 2
      %s21 = sadd.s32 %s14, 1
      %s22 = ssub.s32 %s14, %s21
      %p23 = scmp.eq.s32.totalorder %s22, 0
      %s25 = sadd.s32 %s24, 1
      %s26 = scalar_select %p23, %s24, %s25
      %p29 = pneg %p23
      %p30 = scmp.eq.s32.totalorder %s14, 3
      %p31 = por %p29, %p30
      %p32 = scmp.ne.s32.totalorder %s24, %s27
      %p33 = scmp.eq.s32.totalorder %s14, 0
      %p34 = por %p32, %p33
      %p35 = scmp.ne.s32.totalorder %s24, %s27
      %p36 = scmp.eq.s32.totalorder %s19, 3
      %p37 = por %p35, %p36
      %p38 = scmp.ne.s32.totalorder %s27, %s28
      %p39 = scmp.eq.s32.totalorder %s19, 0
      %p40 = por %p38, %p39
      %p41 = scmp.ne.s32.totalorder %s27, %s28
      %p42 = scmp.eq.s32.totalorder %s20, 3
      %p43 = por %p41, %p42
      %p45 = scmp.ne.s32.totalorder %s28, %s44
      %p46 = scmp.eq.s32.totalorder %s20, 0
      %p47 = por %p45, %p46
      %s49 = sadd.s32 %s48, 1
      %p52 = scmp.eq.s32.totalorder %s14, 3
      %p53 = scmp.ne.s32.totalorder %s48, %s50
      %p54 = scmp.eq.s32.totalorder %s14, 0
      %p55 = por %p53, %p54
      %p56 = scmp.ne.s32.totalorder %s48, %s50
      %p57 = scmp.eq.s32.totalorder %s19, 3
      %p58 = por %p56, %p57
      %p59 = scmp.ne.s32.totalorder %s50, %s51
      %p60 = scmp.eq.s32.totalorder %s19, 0
      %p61 = por %p59, %p60
      %p62 = scmp.ne.s32.totalorder %s50, %s51
      %p63 = scmp.eq.s32.totalorder %s20, 3
      %p64 = por %p62, %p63
      %p66 = scmp.ne.s32.totalorder %s51, %s65
      %p67 = scmp.eq.s32.totalorder %s20, 0
      %p68 = por %p66, %p67
      %s70 = sadd.s32 %s69, 1
      %p73 = scmp.eq.s32.totalorder %s14, 3
      %p74 = scmp.ne.s32.totalorder %s69, %s71
      %p75 = scmp.eq.s32.totalorder %s14, 0
      %p76 = por %p74, %p75
      %p77 = scmp.ne.s32.totalorder %s69, %s71
      %p78 = scmp.eq.s32.totalorder %s19, 3
      %p79 = por %p77, %p78
      %p80 = scmp.ne.s32.totalorder %s71, %s72
      %p81 = scmp.eq.s32.totalorder %s19, 0
      %p82 = por %p80, %p81
      %p83 = scmp.ne.s32.totalorder %s71, %s72
      %p84 = scmp.eq.s32.totalorder %s20, 3
      %p85 = por %p83, %p84
      %p87 = scmp.ne.s32.totalorder %s72, %s86
      %p88 = scmp.eq.s32.totalorder %s20, 0
      %p89 = por %p87, %p88
      %s91 = sadd.s32 %s90, 1
      %p94 = scmp.eq.s32.totalorder %s14, 3
      %p95 = scmp.ne.s32.totalorder %s90, %s92
      %p96 = scmp.eq.s32.totalorder %s14, 0
      %p97 = por %p95, %p96
      %p98 = scmp.ne.s32.totalorder %s90, %s92
      %p99 = scmp.eq.s32.totalorder %s19, 3
      %p100 = por %p98, %p99
      %p101 = scmp.ne.s32.totalorder %s92, %s93
      %p102 = scmp.eq.s32.totalorder %s19, 0
      %p103 = por %p101, %p102
      %p104 = scmp.ne.s32.totalorder %s92, %s93
      %p105 = scmp.eq.s32.totalorder %s20, 3
      %p106 = por %p104, %p105
      %p108 = scmp.ne.s32.totalorder %s93, %s107
      %p109 = scmp.eq.s32.totalorder %s20, 0
      %p110 = por %p108, %p109
      %s112 = sadd.s32 %s111, 1
      %p115 = scmp.eq.s32.totalorder %s14, 3
      %p116 = scmp.ne.s32.totalorder %s111, %s113
      %p117 = scmp.eq.s32.totalorder %s14, 0
      %p118 = por %p116, %p117
      %p119 = scmp.ne.s32.totalorder %s111, %s113
      %p120 = scmp.eq.s32.totalorder %s19, 3
      %p121 = por %p119, %p120
      %p122 = scmp.ne.s32.totalorder %s113, %s114
      %p123 = scmp.eq.s32.totalorder %s19, 0
      %p124 = por %p122, %p123
      %p125 = scmp.ne.s32.totalorder %s113, %s114
      %p126 = scmp.eq.s32.totalorder %s20, 3
      %p127 = por %p125, %p126
      %p129 = scmp.ne.s32.totalorder %s114, %s128
      %p130 = scmp.eq.s32.totalorder %s20, 0
      %p131 = por %p129, %p130
      %s132 = ssub.s32 %s14, %s21
      %p133 = scmp.eq.s32.totalorder %s132, 0
      %s135 = sadd.s32 %s134, 1
      %s136 = scalar_select %p133, %s134, %s135
      %p139 = pneg %p133
      %p140 = scmp.eq.s32.totalorder %s14, 3
      %p141 = por %p139, %p140
      %p142 = scmp.ne.s32.totalorder %s134, %s137
      %p143 = scmp.eq.s32.totalorder %s14, 0
      %p144 = por %p142, %p143
      %p145 = scmp.ne.s32.totalorder %s134, %s137
      %p146 = scmp.eq.s32.totalorder %s19, 3
      %p147 = por %p145, %p146
      %p148 = scmp.ne.s32.totalorder %s137, %s138
      %p149 = scmp.eq.s32.totalorder %s19, 0
      %p150 = por %p148, %p149
      %p151 = scmp.ne.s32.totalorder %s137, %s138
      %p152 = scmp.eq.s32.totalorder %s20, 3
      %p153 = por %p151, %p152
      %p155 = scmp.ne.s32.totalorder %s138, %s154
      %p156 = scmp.eq.s32.totalorder %s20, 0
      %p157 = por %p155, %p156
      %p158 = scmp.le.s32.totalorder 1, %s14
      %p159 = scmp.lt.s32.totalorder %s14, 5
      %p160 = pnand %p158, %p159
      %p161 = pneg %p160
      // Predicated region
      $region9: #{tpu_custom_call.1} parent=5 // pred_check
        _
      $region10: #{tpu_custom_call.1} parent=5 // pred_check_branch
        %163 = sbr.rel (%p160) target = $region12
      $region11: #{tpu_custom_call.1} parent=5 // pred_region
        %s164 = ssub.s32 %s14, 1
        // Predicated region
        $region13: #{tpu_custom_call.1} parent=11 // pred_check
          %p165 = pneg %p61
        $region14: #{tpu_custom_call.1} parent=11 // pred_check_branch
          %167 = sbr.rel (%p165) target = $region16
        $region15: #{tpu_custom_call.1} parent=11 // pred_region
          _
        $region16: #{tpu_custom_call.1} parent=11 // pred_fallthru
          _
        // Predicated region
        $region17: #{tpu_custom_call.1} parent=11 // pred_check
          %p168 = pneg %p82
        $region18: #{tpu_custom_call.1} parent=11 // pred_check_branch
          %170 = sbr.rel (%p168) target = $region20
        $region19: #{tpu_custom_call.1} parent=11 // pred_region
          _
        $region20: #{tpu_custom_call.1} parent=11 // pred_fallthru
          _
        // Predicated region
        $region21: #{tpu_custom_call.1} parent=11 // pred_check
          %p171 = pneg %p103
        $region22: #{tpu_custom_call.1} parent=11 // pred_check_branch
          %173 = sbr.rel (%p171) target = $region24
        $region23: #{tpu_custom_call.1} parent=11 // pred_region
          _
        $region24: #{tpu_custom_call.1} parent=11 // pred_fallthru
          _
        // Predicated region
        $region25: #{tpu_custom_call.1} parent=11 // pred_check
          %p174 = pneg %p124
        $region26: #{tpu_custom_call.1} parent=11 // pred_check_branch
          %176 = sbr.rel (%p174) target = $region28
        $region27: #{tpu_custom_call.1} parent=11 // pred_region
          _
        $region28: #{tpu_custom_call.1} parent=11 // pred_fallthru
          _
      $region12: #{tpu_custom_call.1} parent=5 // pred_fallthru
        _
      %p177 = scmp.lt.s32.totalorder %s14, 4
      // Predicated region
      $region29: #{tpu_custom_call.1} parent=5 // pred_check
        %p178 = pneg %p177
      $region30: #{tpu_custom_call.1} parent=5 // pred_check_branch
        %180 = sbr.rel (%p178) target = $region32
      $region31: #{tpu_custom_call.1} parent=5 // pred_region
        // Predicated region
        $region33: #{tpu_custom_call.1} parent=31 // pred_check
          %p181 = pneg %p34
        $region34: #{tpu_custom_call.1} parent=31 // pred_check_branch
          %183 = sbr.rel (%p181) target = $region36
        $region35: #{tpu_custom_call.1} parent=31 // pred_region
          %s184 = smul.u32 4, %s14
          %p185 = scmp.lt.s32.totalorder %s184, 15
          %s186 = scalar_select %p185, %s184, 15
          %s187 = smul.addr %s186, 8
          %s188 = smul.addr %s187, 4
          %s189 = scalar_lea.vmem %s0, %s188
          %s190 = smul.u32 4, %s14
        $region36: #{tpu_custom_call.1} parent=31 // pred_fallthru
          _
      $region32: #{tpu_custom_call.1} parent=5 // pred_fallthru
        _
      %p191 = scmp.le.s32.totalorder 1, %s14
      %p192 = scmp.lt.s32.totalorder %s14, 5
      %p193 = pnand %p191, %p192
      %p194 = pneg %p193
      // Predicated region
      $region37: #{tpu_custom_call.1} parent=5 // pred_check
        _
      $region38: #{tpu_custom_call.1} parent=5 // pred_check_branch
        %196 = sbr.rel (%p193) target = $region40
      $region39: #{tpu_custom_call.1} parent=5 // pred_region
        %s197 = ssub.s32 %s14, 1
        %s198 = smul.u32 4, %s19
        %p199 = scmp.lt.s32.totalorder %s198, 15
        %s200 = scalar_select %p199, %s198, 15
        %s201 = smul.addr %s200, 8
        %s202 = smul.addr %s201, 4
        %s203 = scalar_lea.vmem %s0, %s202
        %p204 = pneg %p40
        %p205 = pneg %p37
        %p206 = pneg %p61
        %p207 = pneg %p58
        %p208 = pneg %p82
        %p209 = pneg %p79
        %p210 = pneg %p103
        %p211 = pneg %p100
        %p212 = pneg %p124
        %p213 = pneg %p121
        %p214 = pneg %p150
        %p215 = pneg %p147
        %s216 = sand.u32 %s137, 1
        %s217 = scalar_lea.sflag [#allocation3], %s216
        %s218 = sand.u32 %s137, 1
        %s219 = smul.addr %s218, 256
        %s220 = scalar_lea.vmem [#allocation2], %s219
        %s221 = smul.u32 4, %s19
        %p222 = scmp.lt.s32.totalorder %s221, 15
        %s223 = scalar_select %p222, %s221, 15
        %s224 = smul.addr %s223, 8
        %s225 = smul.addr %s224, 4
        %s226 = scalar_lea.vmem %s0, %s225
        %s227 = smul.u32 4, %s19
        %s228 = smul.u32 32, %s19
        %v230 = vld [vmem:[%s226] sm:$0xf]
        %v231 = vld [vmem:[%s226 + $0x4] sm:$0xf]
        %v232 = vld [vmem:[%s226 + $0x8] sm:$0xf]
        %v233 = vld [vmem:[%s226 + $0xc] sm:$0xf]
        %v234 = vld [vmem:[%s226 + $0x10] sm:$0xf]
        %v235 = vld [vmem:[%s226 + $0x14] sm:$0xf]
        %v236 = vld [vmem:[%s226 + $0x18] sm:$0xf]
        %v237 = vld [vmem:[%s226 + $0x1c] sm:$0xf]
        %v238 = vld [vmem:[%s226 + $0x20] sm:$0xf]
        %v239 = vld [vmem:[%s226 + $0x24] sm:$0xf]
        %v240 = vld [vmem:[%s226 + $0x28] sm:$0xf]
        %v241 = vld [vmem:[%s226 + $0x2c] sm:$0xf]
        %v242 = vld [vmem:[%s226 + $0x30] sm:$0xf]
        %v243 = vld [vmem:[%s226 + $0x34] sm:$0xf]
        %v244 = vld [vmem:[%s226 + $0x38] sm:$0xf]
        %v245 = vld [vmem:[%s226 + $0x3c] sm:$0xf]
        %v246 = vld [vmem:[%s226 + $0x40] sm:$0xf]
        %v247 = vld [vmem:[%s226 + $0x44] sm:$0xf]
        %v248 = vld [vmem:[%s226 + $0x48] sm:$0xf]
        %v249 = vld [vmem:[%s226 + $0x4c] sm:$0xf]
        %v250 = vld [vmem:[%s226 + $0x50] sm:$0xf]
        %v251 = vld [vmem:[%s226 + $0x54] sm:$0xf]
        %v252 = vld [vmem:[%s226 + $0x58] sm:$0xf]
        %v253 = vld [vmem:[%s226 + $0x5c] sm:$0xf]
        %v254 = vld [vmem:[%s226 + $0x60] sm:$0xf]
        %v255 = vld [vmem:[%s226 + $0x64] sm:$0xf]
        %v256 = vld [vmem:[%s226 + $0x68] sm:$0xf]
        %v257 = vld [vmem:[%s226 + $0x6c] sm:$0xf]
        %v258 = vld [vmem:[%s226 + $0x70] sm:$0xf]
        %v259 = vld [vmem:[%s226 + $0x74] sm:$0xf]
        %v260 = vld [vmem:[%s226 + $0x78] sm:$0xf]
        %v261 = vld [vmem:[%s226 + $0x7c] sm:$0xf]
        %v262 = vld [vmem:[%s1] sm:$0xff]
        %v263 = vld [vmem:[%s1 + $0x8] sm:$0xff]
        %v264 = vld [vmem:[%s1 + $0x10] sm:$0xff]
        %v265 = vld [vmem:[%s1 + $0x18] sm:$0xff]
        %v266 = vld [vmem:[%s1 + $0x20] sm:$0xff]
        %v267 = vld [vmem:[%s1 + $0x28] sm:$0xff]
        %v268 = vld [vmem:[%s1 + $0x30] sm:$0xff]
        %v269 = vld [vmem:[%s1 + $0x38] sm:$0xff]
        %v270 = vld [vmem:[%s2] sm:$0xf]
        %v272 = vlaneseq
        %v273 = vshrl.u32 %v272, 7
        %v274 = vsub.s32 0, %v273
        %v275 = vrot.slane %v270, %v274
        %v276 = vlaneseq
        %v277 = vshrl.u32 %v276, 7
        %v278 = vsub.s32 1, %v277
        %v279 = vrot.slane %v270, %v278
        %v280 = vlaneseq
        %v281 = vshrl.u32 %v280, 7
        %v282 = vsub.s32 2, %v281
        %v283 = vrot.slane %v270, %v282
        %v319 = vunpack.c.l.b16 %v230
        %v320 = vunpack.c.l.b16 %v231
        %v321 = vunpack.c.l.b16 %v232
        %v322 = vunpack.c.l.b16 %v233
        %v323 = vunpack.c.l.b16 %v234
        %v324 = vunpack.c.l.b16 %v235
        %v325 = vunpack.c.l.b16 %v236
        %v326 = vunpack.c.l.b16 %v237
        %v327 = vunpack.c.l.b16 %v238
        %v328 = vunpack.c.l.b16 %v239
        %v329 = vunpack.c.l.b16 %v240
        %v330 = vunpack.c.l.b16 %v241
        %v331 = vunpack.c.l.b16 %v242
        %v332 = vunpack.c.l.b16 %v243
        %v333 = vunpack.c.l.b16 %v244
        %v334 = vunpack.c.l.b16 %v245
        %v335 = vunpack.c.l.b16 %v246
        %v336 = vunpack.c.l.b16 %v247
        %v337 = vunpack.c.l.b16 %v248
        %v338 = vunpack.c.l.b16 %v249
        %v339 = vunpack.c.l.b16 %v250
        %v340 = vunpack.c.l.b16 %v251
        %v341 = vunpack.c.l.b16 %v252
        %v342 = vunpack.c.l.b16 %v253
        %v343 = vunpack.c.l.b16 %v254
        %v344 = vunpack.c.l.b16 %v255
        %v345 = vunpack.c.l.b16 %v256
        %v346 = vunpack.c.l.b16 %v257
        %v347 = vunpack.c.l.b16 %v258
        %v348 = vunpack.c.l.b16 %v259
        %v349 = vunpack.c.l.b16 %v260
        %v350 = vunpack.c.l.b16 %v261
        %v351 = vpack.c.b16 %v320, %v319
        %v352 = vpack.c.b16 %v322, %v321
        %v353 = vpack.c.b16 %v324, %v323
        %v354 = vpack.c.b16 %v326, %v325
        %v355 = vpack.c.b16 %v328, %v327
        %v356 = vpack.c.b16 %v330, %v329
        %v357 = vpack.c.b16 %v332, %v331
        %v358 = vpack.c.b16 %v334, %v333
        %v359 = vpack.c.b16 %v336, %v335
        %v360 = vpack.c.b16 %v338, %v337
        %v361 = vpack.c.b16 %v340, %v339
        %v362 = vpack.c.b16 %v342, %v341
        %v363 = vpack.c.b16 %v344, %v343
        %v364 = vpack.c.b16 %v346, %v345
        %v365 = vpack.c.b16 %v348, %v347
        %v366 = vpack.c.b16 %v350, %v349
        %v375 = vunpack.c.l.b16 %v262
        %v376 = vunpack.c.h.b16 %v262
        %v377 = vunpack.c.l.b16 %v263
        %v378 = vunpack.c.h.b16 %v263
        %v379 = vunpack.c.l.b16 %v264
        %v380 = vunpack.c.h.b16 %v264
        %v381 = vunpack.c.l.b16 %v265
        %v382 = vunpack.c.h.b16 %v265
        %v383 = vunpack.c.l.b16 %v266
        %v384 = vunpack.c.h.b16 %v266
        %v385 = vunpack.c.l.b16 %v267
        %v386 = vunpack.c.h.b16 %v267
        %v387 = vunpack.c.l.b16 %v268
        %v388 = vunpack.c.h.b16 %v268
        %v389 = vunpack.c.l.b16 %v269
        %v390 = vunpack.c.h.b16 %v269
        %v391 = vpack.c.b16 %v379, %v375
        %v392 = vpack.c.b16 %v380, %v376
        %v393 = vpack.c.b16 %v381, %v377
        %v394 = vpack.c.b16 %v382, %v378
        %v395 = vpack.c.b16 %v387, %v383
        %v396 = vpack.c.b16 %v388, %v384
        %v397 = vpack.c.b16 %v389, %v385
        %v398 = vpack.c.b16 %v390, %v386
        %vm407 = vcmask 261120
        %v409 = vsel %vm407, %v351, 0
        %v412 = vsel %vm407, %v352, 0
        %v415 = vsel %vm407, %v353, 0
        %v418 = vsel %vm407, %v354, 0
        %v421 = vsel %vm407, %v355, 0
        %v424 = vsel %vm407, %v356, 0
        %v427 = vsel %vm407, %v357, 0
        %v430 = vsel %vm407, %v358, 0
        %v433 = vsel %vm407, %v359, 0
        %v436 = vsel %vm407, %v360, 0
        %v439 = vsel %vm407, %v361, 0
        %v442 = vsel %vm407, %v362, 0
        %v445 = vsel %vm407, %v363, 0
        %v448 = vsel %vm407, %v364, 0
        %v451 = vsel %vm407, %v365, 0
        %v454 = vsel %vm407, %v366, 0
        %456 = vmatprep.subr.bf16.mxu0 %v392
        %457 = vmatpush1.bf16.msra.mxu0 %v391
        %458 = vmatprep.subr.bf16.mxu0 %v396
        %459 = vmatpush1.bf16.msra.mxu0 %v395
        %460 = vmatprep.subr.bf16.mxu0 0
        %461 = vmatpush1.bf16.msra.mxu0 0
        %462 = vmatprep.subr.bf16.mxu0 0
        %463 = vmatpush1.bf16.msra.mxu0 0
        %464 = vmatprep.subr.bf16.mxu0 0
        %465 = vmatpush1.bf16.msra.mxu0 0
        %466 = vmatprep.subr.bf16.mxu0 0
        %467 = vmatpush1.bf16.msra.mxu0 0
        %468 = vmatprep.subr.bf16.mxu0 0
        %469 = vmatpush1.bf16.msra.mxu0 0
        %470 = vmatprep.subr.bf16.mxu0 0
        %471 = vmatpush1.bf16.msra.mxu0 0
        %472 = vmatprep.subr.bf16.mxu0 0
        %473 = vmatpush1.bf16.msra.mxu0 0
        %474 = vmatprep.subr.bf16.mxu0 0
        %475 = vmatpush1.bf16.msra.mxu0 0
        %476 = vmatprep.subr.bf16.mxu0 0
        %477 = vmatpush1.bf16.msra.mxu0 0
        %478 = vmatprep.subr.bf16.mxu0 0
        %479 = vmatpush1.bf16.msra.mxu0 0
        %480 = vmatprep.subr.bf16.mxu0 0
        %481 = vmatpush1.bf16.msra.mxu0 0
        %482 = vmatprep.subr.bf16.mxu0 0
        %483 = vmatpush1.bf16.msra.mxu0 0
        %484 = vmatprep.subr.bf16.mxu0 0
        %485 = vmatpush1.bf16.msra.mxu0 0
        %486 = vmatprep.subr.bf16.mxu0 0
        %487 = vmatpush1.bf16.msra.mxu0 0
        %488 = vmatprep.mubr.bf16.mxu0 0
        %489 = vmatmul.mubr.bf16.gmra.mrb[0].mxu0 %v409
        %v490 = vpop.f32.mrb[0].mxu0
        %v491 = vadd.f32 %v275, %v490
        %v492 = vpop.f32.mrb[0].mxu0
        %v493 = vadd.f32 %v279, %v492
        %v494 = vpop.f32.mrb[0].mxu0
        %v495 = vadd.f32 %v275, %v494
        %v496 = vpop.f32.mrb[0].mxu0
        %v497 = vadd.f32 %v279, %v496
        %498 = vmatprep.mubr.bf16.mxu0 0
        %499 = vmatmul.mubr.bf16.gmra.mrb[0].mxu0 %v412
        %v500 = vpop.f32.mrb[0].mxu0
        %v501 = vadd.f32 %v275, %v500
        %v502 = vpop.f32.mrb[0].mxu0
        %v503 = vadd.f32 %v279, %v502
        %v504 = vpop.f32.mrb[0].mxu0
        %v505 = vadd.f32 %v275, %v504
        %v506 = vpop.f32.mrb[0].mxu0
        %v507 = vadd.f32 %v279, %v506
        %508 = vmatprep.mubr.bf16.mxu0 0
        %509 = vmatmul.mubr.bf16.gmra.mrb[0].mxu0 %v415
        %v510 = vpop.f32.mrb[0].mxu0
        %v511 = vadd.f32 %v275, %v510
        %v512 = vpop.f32.mrb[0].mxu0
        %v513 = vadd.f32 %v279, %v512
        %v514 = vpop.f32.mrb[0].mxu0
        %v515 = vadd.f32 %v275, %v514
        %v516 = vpop.f32.mrb[0].mxu0
        %v517 = vadd.f32 %v279, %v516
        %518 = vmatprep.mubr.bf16.mxu0 0
        %519 = vmatmul.mubr.bf16.gmra.mrb[0].mxu0 %v418
        %v520 = vpop.f32.mrb[0].mxu0
        %v521 = vadd.f32 %v275, %v520
        %v522 = vpop.f32.mrb[0].mxu0
        %v523 = vadd.f32 %v279, %v522
        %v524 = vpop.f32.mrb[0].mxu0
        %v525 = vadd.f32 %v275, %v524
        %v526 = vpop.f32.mrb[0].mxu0
        %v527 = vadd.f32 %v279, %v526
        %528 = vmatprep.mubr.bf16.mxu0 0
        %529 = vmatmul.mubr.bf16.gmra.mrb[0].mxu0 %v421
        %v530 = vpop.f32.mrb[0].mxu0
        %v531 = vadd.f32 %v275, %v530
        %v532 = vpop.f32.mrb[0].mxu0
        %v533 = vadd.f32 %v279, %v532
        %v534 = vpop.f32.mrb[0].mxu0
        %v535 = vadd.f32 %v275, %v534
        %v536 = vpop.f32.mrb[0].mxu0
        %v537 = vadd.f32 %v279, %v536
        %538 = vmatprep.mubr.bf16.mxu0 0
        %539 = vmatmul.mubr.bf16.gmra.mrb[0].mxu0 %v424
        %v540 = vpop.f32.mrb[0].mxu0
        %v541 = vadd.f32 %v275, %v540
        %v542 = vpop.f32.mrb[0].mxu0
        %v543 = vadd.f32 %v279, %v542
        %v544 = vpop.f32.mrb[0].mxu0
        %v545 = vadd.f32 %v275, %v544
        %v546 = vpop.f32.mrb[0].mxu0
        %v547 = vadd.f32 %v279, %v546
        %548 = vmatprep.mubr.bf16.mxu0 0
        %549 = vmatmul.mubr.bf16.gmra.mrb[0].mxu0 %v427
        %v550 = vpop.f32.mrb[0].mxu0
        %v551 = vadd.f32 %v275, %v550
        %v552 = vpop.f32.mrb[0].mxu0
        %v553 = vadd.f32 %v279, %v552
        %v554 = vpop.f32.mrb[0].mxu0
        %v555 = vadd.f32 %v275, %v554
        %v556 = vpop.f32.mrb[0].mxu0
        %v557 = vadd.f32 %v279, %v556
        %558 = vmatprep.mubr.bf16.mxu0 0
        %559 = vmatmul.mubr.bf16.gmra.mrb[0].mxu0 %v430
        %v560 = vpop.f32.mrb[0].mxu0
        %v561 = vadd.f32 %v275, %v560
        %v562 = vpop.f32.mrb[0].mxu0
        %v563 = vadd.f32 %v279, %v562
        %v564 = vpop.f32.mrb[0].mxu0
        %v565 = vadd.f32 %v275, %v564
        %v566 = vpop.f32.mrb[0].mxu0
        %v567 = vadd.f32 %v279, %v566
        %568 = vmatprep.mubr.bf16.mxu0 0
        %569 = vmatmul.mubr.bf16.gmra.mrb[0].mxu0 %v433
        %v570 = vpop.f32.mrb[0].mxu0
        %v571 = vadd.f32 %v275, %v570
        %v572 = vpop.f32.mrb[0].mxu0
        %v573 = vadd.f32 %v279, %v572
        %v574 = vpop.f32.mrb[0].mxu0
        %v575 = vadd.f32 %v275, %v574
        %v576 = vpop.f32.mrb[0].mxu0
        %v577 = vadd.f32 %v279, %v576
        %578 = vmatprep.mubr.bf16.mxu0 0
        %579 = vmatmul.mubr.bf16.gmra.mrb[0].mxu0 %v436
        %v580 = vpop.f32.mrb[0].mxu0
        %v581 = vadd.f32 %v275, %v580
        %v582 = vpop.f32.mrb[0].mxu0
        %v583 = vadd.f32 %v279, %v582
        %v584 = vpop.f32.mrb[0].mxu0
        %v585 = vadd.f32 %v275, %v584
        %v586 = vpop.f32.mrb[0].mxu0
        %v587 = vadd.f32 %v279, %v586
        %588 = vmatprep.mubr.bf16.mxu0 0
        %589 = vmatmul.mubr.bf16.gmra.mrb[0].mxu0 %v439
        %v590 = vpop.f32.mrb[0].mxu0
        %v591 = vadd.f32 %v275, %v590
        %v592 = vpop.f32.mrb[0].mxu0
        %v593 = vadd.f32 %v279, %v592
        %v594 = vpop.f32.mrb[0].mxu0
        %v595 = vadd.f32 %v275, %v594
        %v596 = vpop.f32.mrb[0].mxu0
        %v597 = vadd.f32 %v279, %v596
        %598 = vmatprep.mubr.bf16.mxu0 0
        %599 = vmatmul.mubr.bf16.gmra.mrb[0].mxu0 %v442
        %v600 = vpop.f32.mrb[0].mxu0
        %v601 = vadd.f32 %v275, %v600
        %v602 = vpop.f32.mrb[0].mxu0
        %v603 = vadd.f32 %v279, %v602
        %v604 = vpop.f32.mrb[0].mxu0
        %v605 = vadd.f32 %v275, %v604
        %v606 = vpop.f32.mrb[0].mxu0
        %v607 = vadd.f32 %v279, %v606
        %608 = vmatprep.mubr.bf16.mxu0 0
        %609 = vmatmul.mubr.bf16.gmra.mrb[0].mxu0 %v445
        %v610 = vpop.f32.mrb[0].mxu0
        %v611 = vadd.f32 %v275, %v610
        %v612 = vpop.f32.mrb[0].mxu0
        %v613 = vadd.f32 %v279, %v612
        %v614 = vpop.f32.mrb[0].mxu0
        %v615 = vadd.f32 %v275, %v614
        %v616 = vpop.f32.mrb[0].mxu0
        %v617 = vadd.f32 %v279, %v616
        %618 = vmatprep.mubr.bf16.mxu0 0
        %619 = vmatmul.mubr.bf16.gmra.mrb[0].mxu0 %v448
        %v620 = vpop.f32.mrb[0].mxu0
        %v621 = vadd.f32 %v275, %v620
        %v622 = vpop.f32.mrb[0].mxu0
        %v623 = vadd.f32 %v279, %v622
        %v624 = vpop.f32.mrb[0].mxu0
        %v625 = vadd.f32 %v275, %v624
        %v626 = vpop.f32.mrb[0].mxu0
        %v627 = vadd.f32 %v279, %v626
        %628 = vmatprep.mubr.bf16.mxu0 0
        %629 = vmatmul.mubr.bf16.gmra.mrb[0].mxu0 %v451
        %v630 = vpop.f32.mrb[0].mxu0
        %v631 = vadd.f32 %v275, %v630
        %v632 = vpop.f32.mrb[0].mxu0
        %v633 = vadd.f32 %v279, %v632
        %v634 = vpop.f32.mrb[0].mxu0
        %v635 = vadd.f32 %v275, %v634
        %v636 = vpop.f32.mrb[0].mxu0
        %v637 = vadd.f32 %v279, %v636
        %638 = vmatprep.mubr.bf16.mxu0 0
        %639 = vmatmul.mubr.bf16.gmra.mrb[0].mxu0 %v454
        %v640 = vpop.f32.mrb[0].mxu0
        %v641 = vadd.f32 %v275, %v640
        %v642 = vpop.f32.mrb[0].mxu0
        %v643 = vadd.f32 %v279, %v642
        %v644 = vpop.f32.mrb[0].mxu0
        %v645 = vadd.f32 %v275, %v644
        %v646 = vpop.f32.mrb[0].mxu0
        %v647 = vadd.f32 %v279, %v646
        %648 = vdwg.mxu0
        %649 = vmatprep.subr.bf16.mxu0 %v394
        %650 = vmatpush1.bf16.msra.mxu0 %v393
        %651 = vmatprep.subr.bf16.mxu0 %v398
        %652 = vmatpush1.bf16.msra.mxu0 %v397
        %653 = vmatprep.subr.bf16.mxu0 0
        %654 = vmatpush1.bf16.msra.mxu0 0
        %655 = vmatprep.subr.bf16.mxu0 0
        %656 = vmatpush1.bf16.msra.mxu0 0
        %657 = vmatprep.subr.bf16.mxu0 0
        %658 = vmatpush1.bf16.msra.mxu0 0
        %659 = vmatprep.subr.bf16.mxu0 0
        %660 = vmatpush1.bf16.msra.mxu0 0
        %661 = vmatprep.subr.bf16.mxu0 0
        %662 = vmatpush1.bf16.msra.mxu0 0
        %663 = vmatprep.subr.bf16.mxu0 0
        %664 = vmatpush1.bf16.msra.mxu0 0
        %665 = vmatprep.subr.bf16.mxu0 0
        %666 = vmatpush1.bf16.msra.mxu0 0
        %667 = vmatprep.subr.bf16.mxu0 0
        %668 = vmatpush1.bf16.msra.mxu0 0
        %669 = vmatprep.subr.bf16.mxu0 0
        %670 = vmatpush1.bf16.msra.mxu0 0
        %671 = vmatprep.subr.bf16.mxu0 0
        %672 = vmatpush1.bf16.msra.mxu0 0
        %673 = vmatprep.subr.bf16.mxu0 0
        %674 = vmatpush1.bf16.msra.mxu0 0
        %675 = vmatprep.subr.bf16.mxu0 0
        %676 = vmatpush1.bf16.msra.mxu0 0
        %677 = vmatprep.subr.bf16.mxu0 0
        %678 = vmatpush1.bf16.msra.mxu0 0
        %679 = vmatprep.subr.bf16.mxu0 0
        %680 = vmatpush1.bf16.msra.mxu0 0
        %681 = vmatprep.mubr.bf16.mxu0 0
        %682 = vmatmul.mubr.bf16.gmra.mrb[0].mxu0 %v409
        %v683 = vpop.f32.mrb[0].mxu0
        %v684 = vadd.f32 %v283, %v683
        %v685 = vpop.f32.mrb[0].mxu0
        %v686 = vpop.f32.mrb[0].mxu0
        %v687 = vadd.f32 %v283, %v686
        %v688 = vpop.f32.mrb[0].mxu0
        %689 = vmatprep.mubr.bf16.mxu0 0
        %690 = vmatmul.mubr.bf16.gmra.mrb[0].mxu0 %v412
        %v691 = vpop.f32.mrb[0].mxu0
        %v692 = vadd.f32 %v283, %v691
        %v693 = vpop.f32.mrb[0].mxu0
        %v694 = vpop.f32.mrb[0].mxu0
        %v695 = vadd.f32 %v283, %v694
        %v696 = vpop.f32.mrb[0].mxu0
        %697 = vmatprep.mubr.bf16.mxu0 0
        %698 = vmatmul.mubr.bf16.gmra.mrb[0].mxu0 %v415
        %v699 = vpop.f32.mrb[0].mxu0
        %v700 = vadd.f32 %v283, %v699
        %v701 = vpop.f32.mrb[0].mxu0
        %v702 = vpop.f32.mrb[0].mxu0
        %v703 = vadd.f32 %v283, %v702
        %v704 = vpop.f32.mrb[0].mxu0
        %705 = vmatprep.mubr.bf16.mxu0 0
        %706 = vmatmul.mubr.bf16.gmra.mrb[0].mxu0 %v418
        %v707 = vpop.f32.mrb[0].mxu0
        %v708 = vadd.f32 %v283, %v707
        %v709 = vpop.f32.mrb[0].mxu0
        %v710 = vpop.f32.mrb[0].mxu0
        %v711 = vadd.f32 %v283, %v710
        %v712 = vpop.f32.mrb[0].mxu0
        %713 = vmatprep.mubr.bf16.mxu0 0
        %714 = vmatmul.mubr.bf16.gmra.mrb[0].mxu0 %v421
        %v715 = vpop.f32.mrb[0].mxu0
        %v716 = vadd.f32 %v283, %v715
        %v717 = vpop.f32.mrb[0].mxu0
        %v718 = vpop.f32.mrb[0].mxu0
        %v719 = vadd.f32 %v283, %v718
        %v720 = vpop.f32.mrb[0].mxu0
        %721 = vmatprep.mubr.bf16.mxu0 0
        %722 = vmatmul.mubr.bf16.gmra.mrb[0].mxu0 %v424
        %v723 = vpop.f32.mrb[0].mxu0
        %v724 = vadd.f32 %v283, %v723
        %v725 = vpop.f32.mrb[0].mxu0
        %v726 = vpop.f32.mrb[0].mxu0
        %v727 = vadd.f32 %v283, %v726
        %v728 = vpop.f32.mrb[0].mxu0
        %729 = vmatprep.mubr.bf16.mxu0 0
        %730 = vmatmul.mubr.bf16.gmra.mrb[0].mxu0 %v427
        %v731 = vpop.f32.mrb[0].mxu0
        %v732 = vadd.f32 %v283, %v731
        %v733 = vpop.f32.mrb[0].mxu0
        %v734 = vpop.f32.mrb[0].mxu0
        %v735 = vadd.f32 %v283, %v734
        %v736 = vpop.f32.mrb[0].mxu0
        %737 = vmatprep.mubr.bf16.mxu0 0
        %738 = vmatmul.mubr.bf16.gmra.mrb[0].mxu0 %v430
        %v739 = vpop.f32.mrb[0].mxu0
        %v740 = vadd.f32 %v283, %v739
        %v741 = vpop.f32.mrb[0].mxu0
        %v742 = vpop.f32.mrb[0].mxu0
        %v743 = vadd.f32 %v283, %v742
        %v744 = vpop.f32.mrb[0].mxu0
        %745 = vmatprep.mubr.bf16.mxu0 0
        %746 = vmatmul.mubr.bf16.gmra.mrb[0].mxu0 %v433
        %v747 = vpop.f32.mrb[0].mxu0
        %v748 = vadd.f32 %v283, %v747
        %v749 = vpop.f32.mrb[0].mxu0
        %v750 = vpop.f32.mrb[0].mxu0
        %v751 = vadd.f32 %v283, %v750
        %v752 = vpop.f32.mrb[0].mxu0
        %753 = vmatprep.mubr.bf16.mxu0 0
        %754 = vmatmul.mubr.bf16.gmra.mrb[0].mxu0 %v436
        %v755 = vpop.f32.mrb[0].mxu0
        %v756 = vadd.f32 %v283, %v755
        %v757 = vpop.f32.mrb[0].mxu0
        %v758 = vpop.f32.mrb[0].mxu0
        %v759 = vadd.f32 %v283, %v758
        %v760 = vpop.f32.mrb[0].mxu0
        %761 = vmatprep.mubr.bf16.mxu0 0
        %762 = vmatmul.mubr.bf16.gmra.mrb[0].mxu0 %v439
        %v763 = vpop.f32.mrb[0].mxu0
        %v764 = vadd.f32 %v283, %v763
        %v765 = vpop.f32.mrb[0].mxu0
        %v766 = vpop.f32.mrb[0].mxu0
        %v767 = vadd.f32 %v283, %v766
        %v768 = vpop.f32.mrb[0].mxu0
        %769 = vmatprep.mubr.bf16.mxu0 0
        %770 = vmatmul.mubr.bf16.gmra.mrb[0].mxu0 %v442
        %v771 = vpop.f32.mrb[0].mxu0
        %v772 = vadd.f32 %v283, %v771
        %v773 = vpop.f32.mrb[0].mxu0
        %v774 = vpop.f32.mrb[0].mxu0
        %v775 = vadd.f32 %v283, %v774
        %v776 = vpop.f32.mrb[0].mxu0
        %777 = vmatprep.mubr.bf16.mxu0 0
        %778 = vmatmul.mubr.bf16.gmra.mrb[0].mxu0 %v445
        %v779 = vpop.f32.mrb[0].mxu0
        %v780 = vadd.f32 %v283, %v779
        %v781 = vpop.f32.mrb[0].mxu0
        %v782 = vpop.f32.mrb[0].mxu0
        %v783 = vadd.f32 %v283, %v782
        %v784 = vpop.f32.mrb[0].mxu0
        %785 = vmatprep.mubr.bf16.mxu0 0
        %786 = vmatmul.mubr.bf16.gmra.mrb[0].mxu0 %v448
        %v787 = vpop.f32.mrb[0].mxu0
        %v788 = vadd.f32 %v283, %v787
        %v789 = vpop.f32.mrb[0].mxu0
        %v790 = vpop.f32.mrb[0].mxu0
        %v791 = vadd.f32 %v283, %v790
        %v792 = vpop.f32.mrb[0].mxu0
        %793 = vmatprep.mubr.bf16.mxu0 0
        %794 = vmatmul.mubr.bf16.gmra.mrb[0].mxu0 %v451
        %v795 = vpop.f32.mrb[0].mxu0
        %v796 = vadd.f32 %v283, %v795
        %v797 = vpop.f32.mrb[0].mxu0
        %v798 = vpop.f32.mrb[0].mxu0
        %v799 = vadd.f32 %v283, %v798
        %v800 = vpop.f32.mrb[0].mxu0
        %801 = vmatprep.mubr.bf16.mxu0 0
        %802 = vmatmul.mubr.bf16.gmra.mrb[0].mxu0 %v454
        %v803 = vpop.f32.mrb[0].mxu0
        %v804 = vadd.f32 %v283, %v803
        %v805 = vpop.f32.mrb[0].mxu0
        %v806 = vpop.f32.mrb[0].mxu0
        %v807 = vadd.f32 %v283, %v806
        %v808 = vpop.f32.mrb[0].mxu0
        %809 = vdwg.mxu0
        %v810 = vpack.c.bf16 %v495, %v491
        %v811 = vpack.c.bf16 %v505, %v501
        %v812 = vpack.c.bf16 %v515, %v511
        %v813 = vpack.c.bf16 %v525, %v521
        %v814 = vpack.c.bf16 %v535, %v531
        %v815 = vpack.c.bf16 %v545, %v541
        %v816 = vpack.c.bf16 %v555, %v551
        %v817 = vpack.c.bf16 %v565, %v561
        %v818 = vpack.c.bf16 %v575, %v571
        %v819 = vpack.c.bf16 %v585, %v581
        %v820 = vpack.c.bf16 %v595, %v591
        %v821 = vpack.c.bf16 %v605, %v601
        %v822 = vpack.c.bf16 %v615, %v611
        %v823 = vpack.c.bf16 %v625, %v621
        %v824 = vpack.c.bf16 %v635, %v631
        %v825 = vpack.c.bf16 %v645, %v641
        %v826 = vpack.c.bf16 %v497, %v493
        %v827 = vpack.c.bf16 %v507, %v503
        %v828 = vpack.c.bf16 %v517, %v513
        %v829 = vpack.c.bf16 %v527, %v523
        %v830 = vpack.c.bf16 %v537, %v533
        %v831 = vpack.c.bf16 %v547, %v543
        %v832 = vpack.c.bf16 %v557, %v553
        %v833 = vpack.c.bf16 %v567, %v563
        %v834 = vpack.c.bf16 %v577, %v573
        %v835 = vpack.c.bf16 %v587, %v583
        %v836 = vpack.c.bf16 %v597, %v593
        %v837 = vpack.c.bf16 %v607, %v603
        %v838 = vpack.c.bf16 %v617, %v613
        %v839 = vpack.c.bf16 %v627, %v623
        %v840 = vpack.c.bf16 %v637, %v633
        %v841 = vpack.c.bf16 %v647, %v643
        %842 = vmatprep.subr.bf16.mxu0 0
        %843 = vmatpush1.bf16.xpose.msra.mxu0 %v826
        %844 = vmatprep.subr.bf16.mxu0 0
        %845 = vmatpush1.bf16.xpose.msra.mxu0 %v827
        %846 = vmatprep.subr.bf16.mxu0 0
        %847 = vmatpush1.bf16.xpose.msra.mxu0 %v828
        %848 = vmatprep.subr.bf16.mxu0 0
        %849 = vmatpush1.bf16.xpose.msra.mxu0 %v829
        %850 = vmatprep.subr.bf16.mxu0 0
        %851 = vmatpush1.bf16.xpose.msra.mxu0 0
        %852 = vmatprep.subr.bf16.mxu0 0
        %853 = vmatpush1.bf16.xpose.msra.mxu0 0
        %854 = vmatprep.subr.bf16.mxu0 0
        %855 = vmatpush1.bf16.xpose.msra.mxu0 0
        %856 = vmatprep.subr.bf16.mxu0 0
        %857 = vmatpush1.bf16.xpose.msra.mxu0 0
        %858 = vmatprep.subr.bf16.mxu0 0
        %859 = vmatpush1.bf16.xpose.msra.mxu0 0
        %860 = vmatprep.subr.bf16.mxu0 0
        %861 = vmatpush1.bf16.xpose.msra.mxu0 0
        %862 = vmatprep.subr.bf16.mxu0 0
        %863 = vmatpush1.bf16.xpose.msra.mxu0 0
        %864 = vmatprep.subr.bf16.mxu0 0
        %865 = vmatpush1.bf16.xpose.msra.mxu0 0
        %866 = vmatprep.subr.bf16.mxu0 0
        %867 = vmatpush1.bf16.xpose.msra.mxu0 0
        %868 = vmatprep.subr.bf16.mxu0 0
        %869 = vmatpush1.bf16.xpose.msra.mxu0 0
        %870 = vmatprep.subr.bf16.mxu0 0
        %871 = vmatpush1.bf16.xpose.msra.mxu0 0
        %872 = vmatprep.subr.bf16.mxu0 0
        %873 = vmatpush1.bf16.xpose.msra.mxu0 0
        %874 = vmatprep.mubr.bf16.mxu0 0
        %875 = vmatmul.mubr.bf16.gmra.mrb[0].mxu0 %v810
        %v876 = vpop.f32.mrb[0].mxu0
        %v877 = vadd.f32 0.0, %v876
        %v878 = vpop.f32.mrb[0].mxu0
        %v879 = vpop.f32.mrb[0].mxu0
        %v880 = vadd.f32 0.0, %v879
        %v881 = vpop.f32.mrb[0].mxu0
        %882 = vmatprep.mubr.bf16.mxu0 0
        %883 = vmatmul.mubr.bf16.gmra.mrb[0].mxu0 %v811
        %v884 = vpop.f32.mrb[0].mxu0
        %v885 = vadd.f32 0.0, %v884
        %v886 = vpop.f32.mrb[0].mxu0
        %v887 = vpop.f32.mrb[0].mxu0
        %v888 = vadd.f32 0.0, %v887
        %v889 = vpop.f32.mrb[0].mxu0
        %890 = vmatprep.mubr.bf16.mxu0 0
        %891 = vmatmul.mubr.bf16.gmra.mrb[0].mxu0 %v812
        %v892 = vpop.f32.mrb[0].mxu0
        %v893 = vadd.f32 0.0, %v892
        %v894 = vpop.f32.mrb[0].mxu0
        %v895 = vpop.f32.mrb[0].mxu0
        %v896 = vadd.f32 0.0, %v895
        %v897 = vpop.f32.mrb[0].mxu0
        %898 = vmatprep.mubr.bf16.mxu0 0
        %899 = vmatmul.mubr.bf16.gmra.mrb[0].mxu0 %v813
        %v900 = vpop.f32.mrb[0].mxu0
        %v901 = vadd.f32 0.0, %v900
        %v902 = vpop.f32.mrb[0].mxu0
        %v903 = vpop.f32.mrb[0].mxu0
        %v904 = vadd.f32 0.0, %v903
        %v905 = vpop.f32.mrb[0].mxu0
        %906 = vdwg.mxu0
        %907 = vmatprep.subr.bf16.mxu0 0
        %908 = vmatpush1.bf16.xpose.msra.mxu0 %v830
        %909 = vmatprep.subr.bf16.mxu0 0
        %910 = vmatpush1.bf16.xpose.msra.mxu0 %v831
        %911 = vmatprep.subr.bf16.mxu0 0
        %912 = vmatpush1.bf16.xpose.msra.mxu0 %v832
        %913 = vmatprep.subr.bf16.mxu0 0
        %914 = vmatpush1.bf16.xpose.msra.mxu0 %v833
        %915 = vmatprep.subr.bf16.mxu0 0
        %916 = vmatpush1.bf16.xpose.msra.mxu0 0
        %917 = vmatprep.subr.bf16.mxu0 0
        %918 = vmatpush1.bf16.xpose.msra.mxu0 0
        %919 = vmatprep.subr.bf16.mxu0 0
        %920 = vmatpush1.bf16.xpose.msra.mxu0 0
        %921 = vmatprep.subr.bf16.mxu0 0
        %922 = vmatpush1.bf16.xpose.msra.mxu0 0
        %923 = vmatprep.subr.bf16.mxu0 0
        %924 = vmatpush1.bf16.xpose.msra.mxu0 0
        %925 = vmatprep.subr.bf16.mxu0 0
        %926 = vmatpush1.bf16.xpose.msra.mxu0 0
        %927 = vmatprep.subr.bf16.mxu0 0
        %928 = vmatpush1.bf16.xpose.msra.mxu0 0
        %929 = vmatprep.subr.bf16.mxu0 0
        %930 = vmatpush1.bf16.xpose.msra.mxu0 0
        %931 = vmatprep.subr.bf16.mxu0 0
        %932 = vmatpush1.bf16.xpose.msra.mxu0 0
        %933 = vmatprep.subr.bf16.mxu0 0
        %934 = vmatpush1.bf16.xpose.msra.mxu0 0
        %935 = vmatprep.subr.bf16.mxu0 0
        %936 = vmatpush1.bf16.xpose.msra.mxu0 0
        %937 = vmatprep.subr.bf16.mxu0 0
        %938 = vmatpush1.bf16.xpose.msra.mxu0 0
        %939 = vmatprep.mubr.bf16.mxu0 0
        %940 = vmatmul.mubr.bf16.gmra.mrb[0].mxu0 %v814
        %v941 = vpop.f32.mrb[0].mxu0
        %v942 = vadd.f32 0.0, %v941
        %v943 = vpop.f32.mrb[0].mxu0
        %v944 = vpop.f32.mrb[0].mxu0
        %v945 = vadd.f32 0.0, %v944
        %v946 = vpop.f32.mrb[0].mxu0
        %947 = vmatprep.mubr.bf16.mxu0 0
        %948 = vmatmul.mubr.bf16.gmra.mrb[0].mxu0 %v815
        %v949 = vpop.f32.mrb[0].mxu0
        %v950 = vadd.f32 0.0, %v949
        %v951 = vpop.f32.mrb[0].mxu0
        %v952 = vpop.f32.mrb[0].mxu0
        %v953 = vadd.f32 0.0, %v952
        %v954 = vpop.f32.mrb[0].mxu0
        %955 = vmatprep.mubr.bf16.mxu0 0
        %956 = vmatmul.mubr.bf16.gmra.mrb[0].mxu0 %v816
        %v957 = vpop.f32.mrb[0].mxu0
        %v958 = vadd.f32 0.0, %v957
        %v959 = vpop.f32.mrb[0].mxu0
        %v960 = vpop.f32.mrb[0].mxu0
        %v961 = vadd.f32 0.0, %v960
        %v962 = vpop.f32.mrb[0].mxu0
        %963 = vmatprep.mubr.bf16.mxu0 0
        %964 = vmatmul.mubr.bf16.gmra.mrb[0].mxu0 %v817
        %v965 = vpop.f32.mrb[0].mxu0
        %v966 = vadd.f32 0.0, %v965
        %v967 = vpop.f32.mrb[0].mxu0
        %v968 = vpop.f32.mrb[0].mxu0
        %v969 = vadd.f32 0.0, %v968
        %v970 = vpop.f32.mrb[0].mxu0
        %971 = vdwg.mxu0
        %972 = vmatprep.subr.bf16.mxu0 0
        %973 = vmatpush1.bf16.xpose.msra.mxu0 %v834
        %974 = vmatprep.subr.bf16.mxu0 0
        %975 = vmatpush1.bf16.xpose.msra.mxu0 %v835
        %976 = vmatprep.subr.bf16.mxu0 0
        %977 = vmatpush1.bf16.xpose.msra.mxu0 %v836
        %978 = vmatprep.subr.bf16.mxu0 0
        %979 = vmatpush1.bf16.xpose.msra.mxu0 %v837
        %980 = vmatprep.subr.bf16.mxu0 0
        %981 = vmatpush1.bf16.xpose.msra.mxu0 0
        %982 = vmatprep.subr.bf16.mxu0 0
        %983 = vmatpush1.bf16.xpose.msra.mxu0 0
        %984 = vmatprep.subr.bf16.mxu0 0
        %985 = vmatpush1.bf16.xpose.msra.mxu0 0
        %986 = vmatprep.subr.bf16.mxu0 0
        %987 = vmatpush1.bf16.xpose.msra.mxu0 0
        %988 = vmatprep.subr.bf16.mxu0 0
        %989 = vmatpush1.bf16.xpose.msra.mxu0 0
        %990 = vmatprep.subr.bf16.mxu0 0
        %991 = vmatpush1.bf16.xpose.msra.mxu0 0
        %992 = vmatprep.subr.bf16.mxu0 0
        %993 = vmatpush1.bf16.xpose.msra.mxu0 0
        %994 = vmatprep.subr.bf16.mxu0 0
        %995 = vmatpush1.bf16.xpose.msra.mxu0 0
        %996 = vmatprep.subr.bf16.mxu0 0
        %997 = vmatpush1.bf16.xpose.msra.mxu0 0
        %998 = vmatprep.subr.bf16.mxu0 0
        %999 = vmatpush1.bf16.xpose.msra.mxu0 0
        %1000 = vmatprep.subr.bf16.mxu0 0
        %1001 = vmatpush1.bf16.xpose.msra.mxu0 0
        %1002 = vmatprep.subr.bf16.mxu0 0
        %1003 = vmatpush1.bf16.xpose.msra.mxu0 0
        %1004 = vmatprep.mubr.bf16.mxu0 0
        %1005 = vmatmul.mubr.bf16.gmra.mrb[0].mxu0 %v818
        %v1006 = vpop.f32.mrb[0].mxu0
        %v1007 = vadd.f32 0.0, %v1006
        %v1008 = vpop.f32.mrb[0].mxu0
        %v1009 = vpop.f32.mrb[0].mxu0
        %v1010 = vadd.f32 0.0, %v1009
        %v1011 = vpop.f32.mrb[0].mxu0
        %1012 = vmatprep.mubr.bf16.mxu0 0
        %1013 = vmatmul.mubr.bf16.gmra.mrb[0].mxu0 %v819
        %v1014 = vpop.f32.mrb[0].mxu0
        %v1015 = vadd.f32 0.0, %v1014
        %v1016 = vpop.f32.mrb[0].mxu0
        %v1017 = vpop.f32.mrb[0].mxu0
        %v1018 = vadd.f32 0.0, %v1017
        %v1019 = vpop.f32.mrb[0].mxu0
        %1020 = vmatprep.mubr.bf16.mxu0 0
        %1021 = vmatmul.mubr.bf16.gmra.mrb[0].mxu0 %v820
        %v1022 = vpop.f32.mrb[0].mxu0
        %v1023 = vadd.f32 0.0, %v1022
        %v1024 = vpop.f32.mrb[0].mxu0
        %v1025 = vpop.f32.mrb[0].mxu0
        %v1026 = vadd.f32 0.0, %v1025
        %v1027 = vpop.f32.mrb[0].mxu0
        %1028 = vmatprep.mubr.bf16.mxu0 0
        %1029 = vmatmul.mubr.bf16.gmra.mrb[0].mxu0 %v821
        %v1030 = vpop.f32.mrb[0].mxu0
        %v1031 = vadd.f32 0.0, %v1030
        %v1032 = vpop.f32.mrb[0].mxu0
        %v1033 = vpop.f32.mrb[0].mxu0
        %v1034 = vadd.f32 0.0, %v1033
        %v1035 = vpop.f32.mrb[0].mxu0
        %1036 = vdwg.mxu0
        %1037 = vmatprep.subr.bf16.mxu0 0
        %1038 = vmatpush1.bf16.xpose.msra.mxu0 %v838
        %1039 = vmatprep.subr.bf16.mxu0 0
        %1040 = vmatpush1.bf16.xpose.msra.mxu0 %v839
        %1041 = vmatprep.subr.bf16.mxu0 0
        %1042 = vmatpush1.bf16.xpose.msra.mxu0 %v840
        %1043 = vmatprep.subr.bf16.mxu0 0
        %1044 = vmatpush1.bf16.xpose.msra.mxu0 %v841
        %1045 = vmatprep.subr.bf16.mxu0 0
        %1046 = vmatpush1.bf16.xpose.msra.mxu0 0
        %1047 = vmatprep.subr.bf16.mxu0 0
        %1048 = vmatpush1.bf16.xpose.msra.mxu0 0
        %1049 = vmatprep.subr.bf16.mxu0 0
        %1050 = vmatpush1.bf16.xpose.msra.mxu0 0
        %1051 = vmatprep.subr.bf16.mxu0 0
        %1052 = vmatpush1.bf16.xpose.msra.mxu0 0
        %1053 = vmatprep.subr.bf16.mxu0 0
        %1054 = vmatpush1.bf16.xpose.msra.mxu0 0
        %1055 = vmatprep.subr.bf16.mxu0 0
        %1056 = vmatpush1.bf16.xpose.msra.mxu0 0
        %1057 = vmatprep.subr.bf16.mxu0 0
        %1058 = vmatpush1.bf16.xpose.msra.mxu0 0
        %1059 = vmatprep.subr.bf16.mxu0 0
        %1060 = vmatpush1.bf16.xpose.msra.mxu0 0
        %1061 = vmatprep.subr.bf16.mxu0 0
        %1062 = vmatpush1.bf16.xpose.msra.mxu0 0
        %1063 = vmatprep.subr.bf16.mxu0 0
        %1064 = vmatpush1.bf16.xpose.msra.mxu0 0
        %1065 = vmatprep.subr.bf16.mxu0 0
        %1066 = vmatpush1.bf16.xpose.msra.mxu0 0
        %1067 = vmatprep.subr.bf16.mxu0 0
        %1068 = vmatpush1.bf16.xpose.msra.mxu0 0
        %1069 = vmatprep.mubr.bf16.mxu0 0
        %1070 = vmatmul.mubr.bf16.gmra.mrb[0].mxu0 %v822
        %v1071 = vpop.f32.mrb[0].mxu0
        %v1072 = vadd.f32 0.0, %v1071
        %v1073 = vpop.f32.mrb[0].mxu0
        %v1074 = vpop.f32.mrb[0].mxu0
        %v1075 = vadd.f32 0.0, %v1074
        %v1076 = vpop.f32.mrb[0].mxu0
        %1077 = vmatprep.mubr.bf16.mxu0 0
        %1078 = vmatmul.mubr.bf16.gmra.mrb[0].mxu0 %v823
        %v1079 = vpop.f32.mrb[0].mxu0
        %v1080 = vadd.f32 0.0, %v1079
        %v1081 = vpop.f32.mrb[0].mxu0
        %v1082 = vpop.f32.mrb[0].mxu0
        %v1083 = vadd.f32 0.0, %v1082
        %v1084 = vpop.f32.mrb[0].mxu0
        %1085 = vmatprep.mubr.bf16.mxu0 0
        %1086 = vmatmul.mubr.bf16.gmra.mrb[0].mxu0 %v824
        %v1087 = vpop.f32.mrb[0].mxu0
        %v1088 = vadd.f32 0.0, %v1087
        %v1089 = vpop.f32.mrb[0].mxu0
        %v1090 = vpop.f32.mrb[0].mxu0
        %v1091 = vadd.f32 0.0, %v1090
        %v1092 = vpop.f32.mrb[0].mxu0
        %1093 = vmatprep.mubr.bf16.mxu0 0
        %1094 = vmatmul.mubr.bf16.gmra.mrb[0].mxu0 %v825
        %v1095 = vpop.f32.mrb[0].mxu0
        %v1096 = vadd.f32 0.0, %v1095
        %v1097 = vpop.f32.mrb[0].mxu0
        %v1098 = vpop.f32.mrb[0].mxu0
        %v1099 = vadd.f32 0.0, %v1098
        %v1100 = vpop.f32.mrb[0].mxu0
        %1101 = vdwg.mxu0
        %vm1102 = vcmask 523264
        %v1103 = vsel %vm1102, %v877, -inf
        %1104 = vmax.xlane.f32.xlu0 %v1103
        %v1105 = vpop.xlane.xlu0 %1104
        %v1106 = vsel %vm1102, %v880, -inf
        %1107 = vmax.xlane.f32.xlu0 %v1106
        %v1108 = vpop.xlane.xlu0 %1107
        %v1109 = vsel %vm1102, %v885, -inf
        %1110 = vmax.xlane.f32.xlu0 %v1109
        %v1111 = vpop.xlane.xlu0 %1110
        %v1112 = vsel %vm1102, %v888, -inf
        %1113 = vmax.xlane.f32.xlu0 %v1112
        %v1114 = vpop.xlane.xlu0 %1113
        %v1115 = vsel %vm1102, %v893, -inf
        %1116 = vmax.xlane.f32.xlu0 %v1115
        %v1117 = vpop.xlane.xlu0 %1116
        %v1118 = vsel %vm1102, %v896, -inf
        %1119 = vmax.xlane.f32.xlu0 %v1118
        %v1120 = vpop.xlane.xlu0 %1119
        %v1121 = vsel %vm1102, %v901, -inf
        %1122 = vmax.xlane.f32.xlu0 %v1121
        %v1123 = vpop.xlane.xlu0 %1122
        %v1124 = vsel %vm1102, %v904, -inf
        %1125 = vmax.xlane.f32.xlu0 %v1124
        %v1126 = vpop.xlane.xlu0 %1125
        %v1127 = vsel %vm1102, %v942, -inf
        %1128 = vmax.xlane.f32.xlu0 %v1127
        %v1129 = vpop.xlane.xlu0 %1128
        %v1130 = vsel %vm1102, %v945, -inf
        %1131 = vmax.xlane.f32.xlu0 %v1130
        %v1132 = vpop.xlane.xlu0 %1131
        %v1133 = vsel %vm1102, %v950, -inf
        %1134 = vmax.xlane.f32.xlu0 %v1133
        %v1135 = vpop.xlane.xlu0 %1134
        %v1136 = vsel %vm1102, %v953, -inf
        %1137 = vmax.xlane.f32.xlu0 %v1136
        %v1138 = vpop.xlane.xlu0 %1137
        %v1139 = vsel %vm1102, %v958, -inf
        %1140 = vmax.xlane.f32.xlu0 %v1139
        %v1141 = vpop.xlane.xlu0 %1140
        %v1142 = vsel %vm1102, %v961, -inf
        %1143 = vmax.xlane.f32.xlu0 %v1142
        %v1144 = vpop.xlane.xlu0 %1143
        %v1145 = vsel %vm1102, %v966, -inf
        %1146 = vmax.xlane.f32.xlu0 %v1145
        %v1147 = vpop.xlane.xlu0 %1146
        %v1148 = vsel %vm1102, %v969, -inf
        %1149 = vmax.xlane.f32.xlu0 %v1148
        %v1150 = vpop.xlane.xlu0 %1149
        %v1151 = vsel %vm1102, %v1007, -inf
        %1152 = vmax.xlane.f32.xlu0 %v1151
        %v1153 = vpop.xlane.xlu0 %1152
        %v1154 = vsel %vm1102, %v1010, -inf
        %1155 = vmax.xlane.f32.xlu0 %v1154
        %v1156 = vpop.xlane.xlu0 %1155
        %v1157 = vsel %vm1102, %v1015, -inf
        %1158 = vmax.xlane.f32.xlu0 %v1157
        %v1159 = vpop.xlane.xlu0 %1158
        %v1160 = vsel %vm1102, %v1018, -inf
        %1161 = vmax.xlane.f32.xlu0 %v1160
        %v1162 = vpop.xlane.xlu0 %1161
        %v1163 = vsel %vm1102, %v1023, -inf
        %1164 = vmax.xlane.f32.xlu0 %v1163
        %v1165 = vpop.xlane.xlu0 %1164
        %v1166 = vsel %vm1102, %v1026, -inf
        %1167 = vmax.xlane.f32.xlu0 %v1166
        %v1168 = vpop.xlane.xlu0 %1167
        %v1169 = vsel %vm1102, %v1031, -inf
        %1170 = vmax.xlane.f32.xlu0 %v1169
        %v1171 = vpop.xlane.xlu0 %1170
        %v1172 = vsel %vm1102, %v1034, -inf
        %1173 = vmax.xlane.f32.xlu0 %v1172
        %v1174 = vpop.xlane.xlu0 %1173
        %v1175 = vsel %vm1102, %v1072, -inf
        %1176 = vmax.xlane.f32.xlu0 %v1175
        %v1177 = vpop.xlane.xlu0 %1176
        %v1178 = vsel %vm1102, %v1075, -inf
        %1179 = vmax.xlane.f32.xlu0 %v1178
        %v1180 = vpop.xlane.xlu0 %1179
        %v1181 = vsel %vm1102, %v1080, -inf
        %1182 = vmax.xlane.f32.xlu0 %v1181
        %v1183 = vpop.xlane.xlu0 %1182
        %v1184 = vsel %vm1102, %v1083, -inf
        %1185 = vmax.xlane.f32.xlu0 %v1184
        %v1186 = vpop.xlane.xlu0 %1185
        %v1187 = vsel %vm1102, %v1088, -inf
        %1188 = vmax.xlane.f32.xlu0 %v1187
        %v1189 = vpop.xlane.xlu0 %1188
        %v1190 = vsel %vm1102, %v1091, -inf
        %1191 = vmax.xlane.f32.xlu0 %v1190
        %v1192 = vpop.xlane.xlu0 %1191
        %v1193 = vsel %vm1102, %v1096, -inf
        %1194 = vmax.xlane.f32.xlu0 %v1193
        %v1195 = vpop.xlane.xlu0 %1194
        %v1196 = vsel %vm1102, %v1099, -inf
        %1197 = vmax.xlane.f32.xlu0 %v1196
        %v1198 = vpop.xlane.xlu0 %1197
        %v1199 = vsub.f32 %v877, %v1105
        %v1200 = vsub.f32 %v880, %v1108
        %v1201 = vsub.f32 %v885, %v1111
        %v1202 = vsub.f32 %v888, %v1114
        %v1203 = vsub.f32 %v893, %v1117
        %v1204 = vsub.f32 %v896, %v1120
        %v1205 = vsub.f32 %v901, %v1123
        %v1206 = vsub.f32 %v904, %v1126
        %v1207 = vsub.f32 %v942, %v1129
        %v1208 = vsub.f32 %v945, %v1132
        %v1209 = vsub.f32 %v950, %v1135
        %v1210 = vsub.f32 %v953, %v1138
        %v1211 = vsub.f32 %v958, %v1141
        %v1212 = vsub.f32 %v961, %v1144
        %v1213 = vsub.f32 %v966, %v1147
        %v1214 = vsub.f32 %v969, %v1150
        %v1215 = vsub.f32 %v1007, %v1153
        %v1216 = vsub.f32 %v1010, %v1156
        %v1217 = vsub.f32 %v1015, %v1159
        %v1218 = vsub.f32 %v1018, %v1162
        %v1219 = vsub.f32 %v1023, %v1165
        %v1220 = vsub.f32 %v1026, %v1168
        %v1221 = vsub.f32 %v1031, %v1171
        %v1222 = vsub.f32 %v1034, %v1174
        %v1223 = vsub.f32 %v1072, %v1177
        %v1224 = vsub.f32 %v1075, %v1180
        %v1225 = vsub.f32 %v1080, %v1183
        %v1226 = vsub.f32 %v1083, %v1186
        %v1227 = vsub.f32 %v1088, %v1189
        %v1228 = vsub.f32 %v1091, %v1192
        %v1229 = vsub.f32 %v1096, %v1195
        %v1230 = vsub.f32 %v1099, %v1198
        %v1231 = vmul.f32 %v1199, 1.442695
        %v1232 = vpow.pop %v1231
        %v1233 = vmul.f32 %v1200, 1.442695
        %v1234 = vpow.pop %v1233
        %v1235 = vmul.f32 %v1201, 1.442695
        %v1236 = vpow.pop %v1235
        %v1237 = vmul.f32 %v1202, 1.442695
        %v1238 = vpow.pop %v1237
        %v1239 = vmul.f32 %v1203, 1.442695
        %v1240 = vpow.pop %v1239
        %v1241 = vmul.f32 %v1204, 1.442695
        %v1242 = vpow.pop %v1241
        %v1243 = vmul.f32 %v1205, 1.442695
        %v1244 = vpow.pop %v1243
        %v1245 = vmul.f32 %v1206, 1.442695
        %v1246 = vpow.pop %v1245
        %v1247 = vmul.f32 %v1207, 1.442695
        %v1248 = vpow.pop %v1247
        %v1249 = vmul.f32 %v1208, 1.442695
        %v1250 = vpow.pop %v1249
        %v1251 = vmul.f32 %v1209, 1.442695
        %v1252 = vpow.pop %v1251
        %v1253 = vmul.f32 %v1210, 1.442695
        %v1254 = vpow.pop %v1253
        %v1255 = vmul.f32 %v1211, 1.442695
        %v1256 = vpow.pop %v1255
        %v1257 = vmul.f32 %v1212, 1.442695
        %v1258 = vpow.pop %v1257
        %v1259 = vmul.f32 %v1213, 1.442695
        %v1260 = vpow.pop %v1259
        %v1261 = vmul.f32 %v1214, 1.442695
        %v1262 = vpow.pop %v1261
        %v1263 = vmul.f32 %v1215, 1.442695
        %v1264 = vpow.pop %v1263
        %v1265 = vmul.f32 %v1216, 1.442695
        %v1266 = vpow.pop %v1265
        %v1267 = vmul.f32 %v1217, 1.442695
        %v1268 = vpow.pop %v1267
        %v1269 = vmul.f32 %v1218, 1.442695
        %v1270 = vpow.pop %v1269
        %v1271 = vmul.f32 %v1219, 1.442695
        %v1272 = vpow.pop %v1271
        %v1273 = vmul.f32 %v1220, 1.442695
        %v1274 = vpow.pop %v1273
        %v1275 = vmul.f32 %v1221, 1.442695
        %v1276 = vpow.pop %v1275
        %v1277 = vmul.f32 %v1222, 1.442695
        %v1278 = vpow.pop %v1277
        %v1279 = vmul.f32 %v1223, 1.442695
        %v1280 = vpow.pop %v1279
        %v1281 = vmul.f32 %v1224, 1.442695
        %v1282 = vpow.pop %v1281
        %v1283 = vmul.f32 %v1225, 1.442695
        %v1284 = vpow.pop %v1283
        %v1285 = vmul.f32 %v1226, 1.442695
        %v1286 = vpow.pop %v1285
        %v1287 = vmul.f32 %v1227, 1.442695
        %v1288 = vpow.pop %v1287
        %v1289 = vmul.f32 %v1228, 1.442695
        %v1290 = vpow.pop %v1289
        %v1291 = vmul.f32 %v1229, 1.442695
        %v1292 = vpow.pop %v1291
        %v1293 = vmul.f32 %v1230, 1.442695
        %v1294 = vpow.pop %v1293
        %v1295 = vsel %vm1102, %v1232, 0.0
        %1296 = vadd.xlane.f32.xlu0 %v1295
        %v1297 = vpop.xlane.xlu0 %1296
        %v1298 = vsel %vm1102, %v1234, 0.0
        %1299 = vadd.xlane.f32.xlu0 %v1298
        %v1300 = vpop.xlane.xlu0 %1299
        %v1301 = vsel %vm1102, %v1236, 0.0
        %1302 = vadd.xlane.f32.xlu0 %v1301
        %v1303 = vpop.xlane.xlu0 %1302
        %v1304 = vsel %vm1102, %v1238, 0.0
        %1305 = vadd.xlane.f32.xlu0 %v1304
        %v1306 = vpop.xlane.xlu0 %1305
        %v1307 = vsel %vm1102, %v1240, 0.0
        %1308 = vadd.xlane.f32.xlu0 %v1307
        %v1309 = vpop.xlane.xlu0 %1308
        %v1310 = vsel %vm1102, %v1242, 0.0
        %1311 = vadd.xlane.f32.xlu0 %v1310
        %v1312 = vpop.xlane.xlu0 %1311
        %v1313 = vsel %vm1102, %v1244, 0.0
        %1314 = vadd.xlane.f32.xlu0 %v1313
        %v1315 = vpop.xlane.xlu0 %1314
        %v1316 = vsel %vm1102, %v1246, 0.0
        %1317 = vadd.xlane.f32.xlu0 %v1316
        %v1318 = vpop.xlane.xlu0 %1317
        %v1319 = vsel %vm1102, %v1248, 0.0
        %1320 = vadd.xlane.f32.xlu0 %v1319
        %v1321 = vpop.xlane.xlu0 %1320
        %v1322 = vsel %vm1102, %v1250, 0.0
        %1323 = vadd.xlane.f32.xlu0 %v1322
        %v1324 = vpop.xlane.xlu0 %1323
        %v1325 = vsel %vm1102, %v1252, 0.0
        %1326 = vadd.xlane.f32.xlu0 %v1325
        %v1327 = vpop.xlane.xlu0 %1326
        %v1328 = vsel %vm1102, %v1254, 0.0
        %1329 = vadd.xlane.f32.xlu0 %v1328
        %v1330 = vpop.xlane.xlu0 %1329
        %v1331 = vsel %vm1102, %v1256, 0.0
        %1332 = vadd.xlane.f32.xlu0 %v1331
        %v1333 = vpop.xlane.xlu0 %1332
        %v1334 = vsel %vm1102, %v1258, 0.0
        %1335 = vadd.xlane.f32.xlu0 %v1334
        %v1336 = vpop.xlane.xlu0 %1335
        %v1337 = vsel %vm1102, %v1260, 0.0
        %1338 = vadd.xlane.f32.xlu0 %v1337
        %v1339 = vpop.xlane.xlu0 %1338
        %v1340 = vsel %vm1102, %v1262, 0.0
        %1341 = vadd.xlane.f32.xlu0 %v1340
        %v1342 = vpop.xlane.xlu0 %1341
        %v1343 = vsel %vm1102, %v1264, 0.0
        %1344 = vadd.xlane.f32.xlu0 %v1343
        %v1345 = vpop.xlane.xlu0 %1344
        %v1346 = vsel %vm1102, %v1266, 0.0
        %1347 = vadd.xlane.f32.xlu0 %v1346
        %v1348 = vpop.xlane.xlu0 %1347
        %v1349 = vsel %vm1102, %v1268, 0.0
        %1350 = vadd.xlane.f32.xlu0 %v1349
        %v1351 = vpop.xlane.xlu0 %1350
        %v1352 = vsel %vm1102, %v1270, 0.0
        %1353 = vadd.xlane.f32.xlu0 %v1352
        %v1354 = vpop.xlane.xlu0 %1353
        %v1355 = vsel %vm1102, %v1272, 0.0
        %1356 = vadd.xlane.f32.xlu0 %v1355
        %v1357 = vpop.xlane.xlu0 %1356
        %v1358 = vsel %vm1102, %v1274, 0.0
        %1359 = vadd.xlane.f32.xlu0 %v1358
        %v1360 = vpop.xlane.xlu0 %1359
        %v1361 = vsel %vm1102, %v1276, 0.0
        %1362 = vadd.xlane.f32.xlu0 %v1361
        %v1363 = vpop.xlane.xlu0 %1362
        %v1364 = vsel %vm1102, %v1278, 0.0
        %1365 = vadd.xlane.f32.xlu0 %v1364
        %v1366 = vpop.xlane.xlu0 %1365
        %v1367 = vsel %vm1102, %v1280, 0.0
        %1368 = vadd.xlane.f32.xlu0 %v1367
        %v1369 = vpop.xlane.xlu0 %1368
        %v1370 = vsel %vm1102, %v1282, 0.0
        %1371 = vadd.xlane.f32.xlu0 %v1370
        %v1372 = vpop.xlane.xlu0 %1371
        %v1373 = vsel %vm1102, %v1284, 0.0
        %1374 = vadd.xlane.f32.xlu0 %v1373
        %v1375 = vpop.xlane.xlu0 %1374
        %v1376 = vsel %vm1102, %v1286, 0.0
        %1377 = vadd.xlane.f32.xlu0 %v1376
        %v1378 = vpop.xlane.xlu0 %1377
        %v1379 = vsel %vm1102, %v1288, 0.0
        %1380 = vadd.xlane.f32.xlu0 %v1379
        %v1381 = vpop.xlane.xlu0 %1380
        %v1382 = vsel %vm1102, %v1290, 0.0
        %1383 = vadd.xlane.f32.xlu0 %v1382
        %v1384 = vpop.xlane.xlu0 %1383
        %v1385 = vsel %vm1102, %v1292, 0.0
        %1386 = vadd.xlane.f32.xlu0 %v1385
        %v1387 = vpop.xlane.xlu0 %1386
        %v1388 = vsel %vm1102, %v1294, 0.0
        %1389 = vadd.xlane.f32.xlu0 %v1388
        %v1390 = vpop.xlane.xlu0 %1389
        %v1391 = vrcp.pop %v1297
        %v1392 = vrcp.pop %v1300
        %v1393 = vrcp.pop %v1303
        %v1394 = vrcp.pop %v1306
        %v1395 = vrcp.pop %v1309
        %v1396 = vrcp.pop %v1312
        %v1397 = vrcp.pop %v1315
        %v1398 = vrcp.pop %v1318
        %v1399 = vrcp.pop %v1321
        %v1400 = vrcp.pop %v1324
        %v1401 = vrcp.pop %v1327
        %v1402 = vrcp.pop %v1330
        %v1403 = vrcp.pop %v1333
        %v1404 = vrcp.pop %v1336
        %v1405 = vrcp.pop %v1339
        %v1406 = vrcp.pop %v1342
        %v1407 = vrcp.pop %v1345
        %v1408 = vrcp.pop %v1348
        %v1409 = vrcp.pop %v1351
        %v1410 = vrcp.pop %v1354
        %v1411 = vrcp.pop %v1357
        %v1412 = vrcp.pop %v1360
        %v1413 = vrcp.pop %v1363
        %v1414 = vrcp.pop %v1366
        %v1415 = vrcp.pop %v1369
        %v1416 = vrcp.pop %v1372
        %v1417 = vrcp.pop %v1375
        %v1418 = vrcp.pop %v1378
        %v1419 = vrcp.pop %v1381
        %v1420 = vrcp.pop %v1384
        %v1421 = vrcp.pop %v1387
        %v1422 = vrcp.pop %v1390
        %v1423 = vmul.f32 %v1232, %v1391
        %v1424 = vmul.f32 %v1234, %v1392
        %v1425 = vmul.f32 %v1236, %v1393
        %v1426 = vmul.f32 %v1238, %v1394
        %v1427 = vmul.f32 %v1240, %v1395
        %v1428 = vmul.f32 %v1242, %v1396
        %v1429 = vmul.f32 %v1244, %v1397
        %v1430 = vmul.f32 %v1246, %v1398
        %v1431 = vmul.f32 %v1248, %v1399
        %v1432 = vmul.f32 %v1250, %v1400
        %v1433 = vmul.f32 %v1252, %v1401
        %v1434 = vmul.f32 %v1254, %v1402
        %v1435 = vmul.f32 %v1256, %v1403
        %v1436 = vmul.f32 %v1258, %v1404
        %v1437 = vmul.f32 %v1260, %v1405
        %v1438 = vmul.f32 %v1262, %v1406
        %v1439 = vmul.f32 %v1264, %v1407
        %v1440 = vmul.f32 %v1266, %v1408
        %v1441 = vmul.f32 %v1268, %v1409
        %v1442 = vmul.f32 %v1270, %v1410
        %v1443 = vmul.f32 %v1272, %v1411
        %v1444 = vmul.f32 %v1274, %v1412
        %v1445 = vmul.f32 %v1276, %v1413
        %v1446 = vmul.f32 %v1278, %v1414
        %v1447 = vmul.f32 %v1280, %v1415
        %v1448 = vmul.f32 %v1282, %v1416
        %v1449 = vmul.f32 %v1284, %v1417
        %v1450 = vmul.f32 %v1286, %v1418
        %v1451 = vmul.f32 %v1288, %v1419
        %v1452 = vmul.f32 %v1290, %v1420
        %v1453 = vmul.f32 %v1292, %v1421
        %v1454 = vmul.f32 %v1294, %v1422
        %v1455 = vsel %vm1102, %v1423, 0.0
        %1456 = vadd.xlane.f32.xlu0 %v1455
        %v1457 = vpop.xlane.xlu0 %1456
        %v1458 = vsel %vm1102, %v1424, 0.0
        %1459 = vadd.xlane.f32.xlu0 %v1458
        %v1460 = vpop.xlane.xlu0 %1459
        %v1461 = vsel %vm1102, %v1425, 0.0
        %1462 = vadd.xlane.f32.xlu0 %v1461
        %v1463 = vpop.xlane.xlu0 %1462
        %v1464 = vsel %vm1102, %v1426, 0.0
        %1465 = vadd.xlane.f32.xlu0 %v1464
        %v1466 = vpop.xlane.xlu0 %1465
        %v1467 = vsel %vm1102, %v1427, 0.0
        %1468 = vadd.xlane.f32.xlu0 %v1467
        %v1469 = vpop.xlane.xlu0 %1468
        %v1470 = vsel %vm1102, %v1428, 0.0
        %1471 = vadd.xlane.f32.xlu0 %v1470
        %v1472 = vpop.xlane.xlu0 %1471
        %v1473 = vsel %vm1102, %v1429, 0.0
        %1474 = vadd.xlane.f32.xlu0 %v1473
        %v1475 = vpop.xlane.xlu0 %1474
        %v1476 = vsel %vm1102, %v1430, 0.0
        %1477 = vadd.xlane.f32.xlu0 %v1476
        %v1478 = vpop.xlane.xlu0 %1477
        %v1479 = vsel %vm1102, %v1431, 0.0
        %1480 = vadd.xlane.f32.xlu0 %v1479
        %v1481 = vpop.xlane.xlu0 %1480
        %v1482 = vsel %vm1102, %v1432, 0.0
        %1483 = vadd.xlane.f32.xlu0 %v1482
        %v1484 = vpop.xlane.xlu0 %1483
        %v1485 = vsel %vm1102, %v1433, 0.0
        %1486 = vadd.xlane.f32.xlu0 %v1485
        %v1487 = vpop.xlane.xlu0 %1486
        %v1488 = vsel %vm1102, %v1434, 0.0
        %1489 = vadd.xlane.f32.xlu0 %v1488
        %v1490 = vpop.xlane.xlu0 %1489
        %v1491 = vsel %vm1102, %v1435, 0.0
        %1492 = vadd.xlane.f32.xlu0 %v1491
        %v1493 = vpop.xlane.xlu0 %1492
        %v1494 = vsel %vm1102, %v1436, 0.0
        %1495 = vadd.xlane.f32.xlu0 %v1494
        %v1496 = vpop.xlane.xlu0 %1495
        %v1497 = vsel %vm1102, %v1437, 0.0
        %1498 = vadd.xlane.f32.xlu0 %v1497
        %v1499 = vpop.xlane.xlu0 %1498
        %v1500 = vsel %vm1102, %v1438, 0.0
        %1501 = vadd.xlane.f32.xlu0 %v1500
        %v1502 = vpop.xlane.xlu0 %1501
        %v1503 = vsel %vm1102, %v1439, 0.0
        %1504 = vadd.xlane.f32.xlu0 %v1503
        %v1505 = vpop.xlane.xlu0 %1504
        %v1506 = vsel %vm1102, %v1440, 0.0
        %1507 = vadd.xlane.f32.xlu0 %v1506
        %v1508 = vpop.xlane.xlu0 %1507
        %v1509 = vsel %vm1102, %v1441, 0.0
        %1510 = vadd.xlane.f32.xlu0 %v1509
        %v1511 = vpop.xlane.xlu0 %1510
        %v1512 = vsel %vm1102, %v1442, 0.0
        %1513 = vadd.xlane.f32.xlu0 %v1512
        %v1514 = vpop.xlane.xlu0 %1513
        %v1515 = vsel %vm1102, %v1443, 0.0
        %1516 = vadd.xlane.f32.xlu0 %v1515
        %v1517 = vpop.xlane.xlu0 %1516
        %v1518 = vsel %vm1102, %v1444, 0.0
        %1519 = vadd.xlane.f32.xlu0 %v1518
        %v1520 = vpop.xlane.xlu0 %1519
        %v1521 = vsel %vm1102, %v1445, 0.0
        %1522 = vadd.xlane.f32.xlu0 %v1521
        %v1523 = vpop.xlane.xlu0 %1522
        %v1524 = vsel %vm1102, %v1446, 0.0
        %1525 = vadd.xlane.f32.xlu0 %v1524
        %v1526 = vpop.xlane.xlu0 %1525
        %v1527 = vsel %vm1102, %v1447, 0.0
        %1528 = vadd.xlane.f32.xlu0 %v1527
        %v1529 = vpop.xlane.xlu0 %1528
        %v1530 = vsel %vm1102, %v1448, 0.0
        %1531 = vadd.xlane.f32.xlu0 %v1530
        %v1532 = vpop.xlane.xlu0 %1531
        %v1533 = vsel %vm1102, %v1449, 0.0
        %1534 = vadd.xlane.f32.xlu0 %v1533
        %v1535 = vpop.xlane.xlu0 %1534
        %v1536 = vsel %vm1102, %v1450, 0.0
        %1537 = vadd.xlane.f32.xlu0 %v1536
        %v1538 = vpop.xlane.xlu0 %1537
        %v1539 = vsel %vm1102, %v1451, 0.0
        %1540 = vadd.xlane.f32.xlu0 %v1539
        %v1541 = vpop.xlane.xlu0 %1540
        %v1542 = vsel %vm1102, %v1452, 0.0
        %1543 = vadd.xlane.f32.xlu0 %v1542
        %v1544 = vpop.xlane.xlu0 %1543
        %v1545 = vsel %vm1102, %v1453, 0.0
        %1546 = vadd.xlane.f32.xlu0 %v1545
        %v1547 = vpop.xlane.xlu0 %1546
        %v1548 = vsel %vm1102, %v1454, 0.0
        %1549 = vadd.xlane.f32.xlu0 %v1548
        %v1550 = vpop.xlane.xlu0 %1549
        %v1551 = vadd.f32 %v1457, 1e-08
        %v1552 = vadd.f32 %v1460, 1e-08
        %v1553 = vadd.f32 %v1463, 1e-08
        %v1554 = vadd.f32 %v1466, 1e-08
        %v1555 = vadd.f32 %v1469, 1e-08
        %v1556 = vadd.f32 %v1472, 1e-08
        %v1557 = vadd.f32 %v1475, 1e-08
        %v1558 = vadd.f32 %v1478, 1e-08
        %v1559 = vadd.f32 %v1481, 1e-08
        %v1560 = vadd.f32 %v1484, 1e-08
        %v1561 = vadd.f32 %v1487, 1e-08
        %v1562 = vadd.f32 %v1490, 1e-08
        %v1563 = vadd.f32 %v1493, 1e-08
        %v1564 = vadd.f32 %v1496, 1e-08
        %v1565 = vadd.f32 %v1499, 1e-08
        %v1566 = vadd.f32 %v1502, 1e-08
        %v1567 = vadd.f32 %v1505, 1e-08
        %v1568 = vadd.f32 %v1508, 1e-08
        %v1569 = vadd.f32 %v1511, 1e-08
        %v1570 = vadd.f32 %v1514, 1e-08
        %v1571 = vadd.f32 %v1517, 1e-08
        %v1572 = vadd.f32 %v1520, 1e-08
        %v1573 = vadd.f32 %v1523, 1e-08
        %v1574 = vadd.f32 %v1526, 1e-08
        %v1575 = vadd.f32 %v1529, 1e-08
        %v1576 = vadd.f32 %v1532, 1e-08
        %v1577 = vadd.f32 %v1535, 1e-08
        %v1578 = vadd.f32 %v1538, 1e-08
        %v1579 = vadd.f32 %v1541, 1e-08
        %v1580 = vadd.f32 %v1544, 1e-08
        %v1581 = vadd.f32 %v1547, 1e-08
        %v1582 = vadd.f32 %v1550, 1e-08
        %v1583 = vrcp.pop %v1551
        %v1584 = vrcp.pop %v1552
        %v1585 = vrcp.pop %v1553
        %v1586 = vrcp.pop %v1554
        %v1587 = vrcp.pop %v1555
        %v1588 = vrcp.pop %v1556
        %v1589 = vrcp.pop %v1557
        %v1590 = vrcp.pop %v1558
        %v1591 = vrcp.pop %v1559
        %v1592 = vrcp.pop %v1560
        %v1593 = vrcp.pop %v1561
        %v1594 = vrcp.pop %v1562
        %v1595 = vrcp.pop %v1563
        %v1596 = vrcp.pop %v1564
        %v1597 = vrcp.pop %v1565
        %v1598 = vrcp.pop %v1566
        %v1599 = vrcp.pop %v1567
        %v1600 = vrcp.pop %v1568
        %v1601 = vrcp.pop %v1569
        %v1602 = vrcp.pop %v1570
        %v1603 = vrcp.pop %v1571
        %v1604 = vrcp.pop %v1572
        %v1605 = vrcp.pop %v1573
        %v1606 = vrcp.pop %v1574
        %v1607 = vrcp.pop %v1575
        %v1608 = vrcp.pop %v1576
        %v1609 = vrcp.pop %v1577
        %v1610 = vrcp.pop %v1578
        %v1611 = vrcp.pop %v1579
        %v1612 = vrcp.pop %v1580
        %v1613 = vrcp.pop %v1581
        %v1614 = vrcp.pop %v1582
        %v1615 = vmul.f32 %v1423, %v1583
        %v1616 = vmul.f32 %v1424, %v1584
        %v1617 = vmul.f32 %v1425, %v1585
        %v1618 = vmul.f32 %v1426, %v1586
        %v1619 = vmul.f32 %v1427, %v1587
        %v1620 = vmul.f32 %v1428, %v1588
        %v1621 = vmul.f32 %v1429, %v1589
        %v1622 = vmul.f32 %v1430, %v1590
        %v1623 = vmul.f32 %v1431, %v1591
        %v1624 = vmul.f32 %v1432, %v1592
        %v1625 = vmul.f32 %v1433, %v1593
        %v1626 = vmul.f32 %v1434, %v1594
        %v1627 = vmul.f32 %v1435, %v1595
        %v1628 = vmul.f32 %v1436, %v1596
        %v1629 = vmul.f32 %v1437, %v1597
        %v1630 = vmul.f32 %v1438, %v1598
        %v1631 = vmul.f32 %v1439, %v1599
        %v1632 = vmul.f32 %v1440, %v1600
        %v1633 = vmul.f32 %v1441, %v1601
        %v1634 = vmul.f32 %v1442, %v1602
        %v1635 = vmul.f32 %v1443, %v1603
        %v1636 = vmul.f32 %v1444, %v1604
        %v1637 = vmul.f32 %v1445, %v1605
        %v1638 = vmul.f32 %v1446, %v1606
        %v1639 = vmul.f32 %v1447, %v1607
        %v1640 = vmul.f32 %v1448, %v1608
        %v1641 = vmul.f32 %v1449, %v1609
        %v1642 = vmul.f32 %v1450, %v1610
        %v1643 = vmul.f32 %v1451, %v1611
        %v1644 = vmul.f32 %v1452, %v1612
        %v1645 = vmul.f32 %v1453, %v1613
        %v1646 = vmul.f32 %v1454, %v1614
        %v1647 = vpack.c.bf16 %v687, %v684
        %v1648 = vpack.c.bf16 %v695, %v692
        %v1649 = vpack.c.bf16 %v703, %v700
        %v1650 = vpack.c.bf16 %v711, %v708
        %v1651 = vpack.c.bf16 %v719, %v716
        %v1652 = vpack.c.bf16 %v727, %v724
        %v1653 = vpack.c.bf16 %v735, %v732
        %v1654 = vpack.c.bf16 %v743, %v740
        %v1655 = vpack.c.bf16 %v751, %v748
        %v1656 = vpack.c.bf16 %v759, %v756
        %v1657 = vpack.c.bf16 %v767, %v764
        %v1658 = vpack.c.bf16 %v775, %v772
        %v1659 = vpack.c.bf16 %v783, %v780
        %v1660 = vpack.c.bf16 %v791, %v788
        %v1661 = vpack.c.bf16 %v799, %v796
        %v1662 = vpack.c.bf16 %v807, %v804
        %v1663 = vpack.c.bf16 %v1616, %v1615
        %v1664 = vpack.c.bf16 %v1618, %v1617
        %v1665 = vpack.c.bf16 %v1620, %v1619
        %v1666 = vpack.c.bf16 %v1622, %v1621
        %v1667 = vpack.c.bf16 %v1624, %v1623
        %v1668 = vpack.c.bf16 %v1626, %v1625
        %v1669 = vpack.c.bf16 %v1628, %v1627
        %v1670 = vpack.c.bf16 %v1630, %v1629
        %v1671 = vpack.c.bf16 %v1632, %v1631
        %v1672 = vpack.c.bf16 %v1634, %v1633
        %v1673 = vpack.c.bf16 %v1636, %v1635
        %v1674 = vpack.c.bf16 %v1638, %v1637
        %v1675 = vpack.c.bf16 %v1640, %v1639
        %v1676 = vpack.c.bf16 %v1642, %v1641
        %v1677 = vpack.c.bf16 %v1644, %v1643
        %v1678 = vpack.c.bf16 %v1646, %v1645
        %v1680 = vsel %vm1102, %v1663, 0
        %v1683 = vsel %vm1102, %v1664, 0
        %v1686 = vsel %vm1102, %v1665, 0
        %v1689 = vsel %vm1102, %v1666, 0
        %1691 = vmatprep.subr.bf16.mxu0 0
        %1692 = vmatpush1.bf16.msra.mxu0 %v1647
        %1693 = vmatprep.subr.bf16.mxu0 0
        %1694 = vmatpush1.bf16.msra.mxu0 %v1648
        %1695 = vmatprep.subr.bf16.mxu0 0
        %1696 = vmatpush1.bf16.msra.mxu0 %v1649
        %1697 = vmatprep.subr.bf16.mxu0 0
        %1698 = vmatpush1.bf16.msra.mxu0 %v1650
        %1699 = vmatprep.subr.bf16.mxu0 0
        %1700 = vmatpush1.bf16.msra.mxu0 0
        %1701 = vmatprep.subr.bf16.mxu0 0
        %1702 = vmatpush1.bf16.msra.mxu0 0
        %1703 = vmatprep.subr.bf16.mxu0 0
        %1704 = vmatpush1.bf16.msra.mxu0 0
        %1705 = vmatprep.subr.bf16.mxu0 0
        %1706 = vmatpush1.bf16.msra.mxu0 0
        %1707 = vmatprep.subr.bf16.mxu0 0
        %1708 = vmatpush1.bf16.msra.mxu0 0
        %1709 = vmatprep.subr.bf16.mxu0 0
        %1710 = vmatpush1.bf16.msra.mxu0 0
        %1711 = vmatprep.subr.bf16.mxu0 0
        %1712 = vmatpush1.bf16.msra.mxu0 0
        %1713 = vmatprep.subr.bf16.mxu0 0
        %1714 = vmatpush1.bf16.msra.mxu0 0
        %1715 = vmatprep.subr.bf16.mxu0 0
        %1716 = vmatpush1.bf16.msra.mxu0 0
        %1717 = vmatprep.subr.bf16.mxu0 0
        %1718 = vmatpush1.bf16.msra.mxu0 0
        %1719 = vmatprep.subr.bf16.mxu0 0
        %1720 = vmatpush1.bf16.msra.mxu0 0
        %1721 = vmatprep.subr.bf16.mxu0 0
        %1722 = vmatpush1.bf16.msra.mxu0 0
        %1723 = vmatprep.mubr.bf16.mxu0 0
        %1724 = vmatmul.mubr.bf16.gmra.mrb[0].mxu0 %v1680
        %v1725 = vpop.f32.mrb[0].mxu0
        %v1726 = vadd.f32 0.0, %v1725
        %v1727 = vpop.f32.mrb[0].mxu0
        %v1728 = vpop.f32.mrb[0].mxu0
        %v1729 = vadd.f32 0.0, %v1728
        %v1730 = vpop.f32.mrb[0].mxu0
        %1731 = vmatprep.mubr.bf16.mxu0 0
        %1732 = vmatmul.mubr.bf16.gmra.mrb[0].mxu0 %v1683
        %v1733 = vpop.f32.mrb[0].mxu0
        %v1734 = vadd.f32 0.0, %v1733
        %v1735 = vpop.f32.mrb[0].mxu0
        %v1736 = vpop.f32.mrb[0].mxu0
        %v1737 = vadd.f32 0.0, %v1736
        %v1738 = vpop.f32.mrb[0].mxu0
        %1739 = vmatprep.mubr.bf16.mxu0 0
        %1740 = vmatmul.mubr.bf16.gmra.mrb[0].mxu0 %v1686
        %v1741 = vpop.f32.mrb[0].mxu0
        %v1742 = vadd.f32 0.0, %v1741
        %v1743 = vpop.f32.mrb[0].mxu0
        %v1744 = vpop.f32.mrb[0].mxu0
        %v1745 = vadd.f32 0.0, %v1744
        %v1746 = vpop.f32.mrb[0].mxu0
        %1747 = vmatprep.mubr.bf16.mxu0 0
        %1748 = vmatmul.mubr.bf16.gmra.mrb[0].mxu0 %v1689
        %v1749 = vpop.f32.mrb[0].mxu0
        %v1750 = vadd.f32 0.0, %v1749
        %v1751 = vpop.f32.mrb[0].mxu0
        %v1752 = vpop.f32.mrb[0].mxu0
        %v1753 = vadd.f32 0.0, %v1752
        %v1754 = vpop.f32.mrb[0].mxu0
        %1755 = vdwg.mxu0
        %v1757 = vsel %vm1102, %v1667, 0
        %v1760 = vsel %vm1102, %v1668, 0
        %v1763 = vsel %vm1102, %v1669, 0
        %v1766 = vsel %vm1102, %v1670, 0
        %1768 = vmatprep.subr.bf16.mxu0 0
        %1769 = vmatpush1.bf16.msra.mxu0 %v1651
        %1770 = vmatprep.subr.bf16.mxu0 0
        %1771 = vmatpush1.bf16.msra.mxu0 %v1652
        %1772 = vmatprep.subr.bf16.mxu0 0
        %1773 = vmatpush1.bf16.msra.mxu0 %v1653
        %1774 = vmatprep.subr.bf16.mxu0 0
        %1775 = vmatpush1.bf16.msra.mxu0 %v1654
        %1776 = vmatprep.subr.bf16.mxu0 0
        %1777 = vmatpush1.bf16.msra.mxu0 0
        %1778 = vmatprep.subr.bf16.mxu0 0
        %1779 = vmatpush1.bf16.msra.mxu0 0
        %1780 = vmatprep.subr.bf16.mxu0 0
        %1781 = vmatpush1.bf16.msra.mxu0 0
        %1782 = vmatprep.subr.bf16.mxu0 0
        %1783 = vmatpush1.bf16.msra.mxu0 0
        %1784 = vmatprep.subr.bf16.mxu0 0
        %1785 = vmatpush1.bf16.msra.mxu0 0
        %1786 = vmatprep.subr.bf16.mxu0 0
        %1787 = vmatpush1.bf16.msra.mxu0 0
        %1788 = vmatprep.subr.bf16.mxu0 0
        %1789 = vmatpush1.bf16.msra.mxu0 0
        %1790 = vmatprep.subr.bf16.mxu0 0
        %1791 = vmatpush1.bf16.msra.mxu0 0
        %1792 = vmatprep.subr.bf16.mxu0 0
        %1793 = vmatpush1.bf16.msra.mxu0 0
        %1794 = vmatprep.subr.bf16.mxu0 0
        %1795 = vmatpush1.bf16.msra.mxu0 0
        %1796 = vmatprep.subr.bf16.mxu0 0
        %1797 = vmatpush1.bf16.msra.mxu0 0
        %1798 = vmatprep.subr.bf16.mxu0 0
        %1799 = vmatpush1.bf16.msra.mxu0 0
        %1800 = vmatprep.mubr.bf16.mxu0 0
        %1801 = vmatmul.mubr.bf16.gmra.mrb[0].mxu0 %v1757
        %v1802 = vpop.f32.mrb[0].mxu0
        %v1803 = vadd.f32 0.0, %v1802
        %v1804 = vpop.f32.mrb[0].mxu0
        %v1805 = vpop.f32.mrb[0].mxu0
        %v1806 = vadd.f32 0.0, %v1805
        %v1807 = vpop.f32.mrb[0].mxu0
        %1808 = vmatprep.mubr.bf16.mxu0 0
        %1809 = vmatmul.mubr.bf16.gmra.mrb[0].mxu0 %v1760
        %v1810 = vpop.f32.mrb[0].mxu0
        %v1811 = vadd.f32 0.0, %v1810
        %v1812 = vpop.f32.mrb[0].mxu0
        %v1813 = vpop.f32.mrb[0].mxu0
        %v1814 = vadd.f32 0.0, %v1813
        %v1815 = vpop.f32.mrb[0].mxu0
        %1816 = vmatprep.mubr.bf16.mxu0 0
        %1817 = vmatmul.mubr.bf16.gmra.mrb[0].mxu0 %v1763
        %v1818 = vpop.f32.mrb[0].mxu0
        %v1819 = vadd.f32 0.0, %v1818
        %v1820 = vpop.f32.mrb[0].mxu0
        %v1821 = vpop.f32.mrb[0].mxu0
        %v1822 = vadd.f32 0.0, %v1821
        %v1823 = vpop.f32.mrb[0].mxu0
        %1824 = vmatprep.mubr.bf16.mxu0 0
        %1825 = vmatmul.mubr.bf16.gmra.mrb[0].mxu0 %v1766
        %v1826 = vpop.f32.mrb[0].mxu0
        %v1827 = vadd.f32 0.0, %v1826
        %v1828 = vpop.f32.mrb[0].mxu0
        %v1829 = vpop.f32.mrb[0].mxu0
        %v1830 = vadd.f32 0.0, %v1829
        %v1831 = vpop.f32.mrb[0].mxu0
        %1832 = vdwg.mxu0
        %v1834 = vsel %vm1102, %v1671, 0
        %v1837 = vsel %vm1102, %v1672, 0
        %v1840 = vsel %vm1102, %v1673, 0
        %v1843 = vsel %vm1102, %v1674, 0
        %1845 = vmatprep.subr.bf16.mxu0 0
        %1846 = vmatpush1.bf16.msra.mxu0 %v1655
        %1847 = vmatprep.subr.bf16.mxu0 0
        %1848 = vmatpush1.bf16.msra.mxu0 %v1656
        %1849 = vmatprep.subr.bf16.mxu0 0
        %1850 = vmatpush1.bf16.msra.mxu0 %v1657
        %1851 = vmatprep.subr.bf16.mxu0 0
        %1852 = vmatpush1.bf16.msra.mxu0 %v1658
        %1853 = vmatprep.subr.bf16.mxu0 0
        %1854 = vmatpush1.bf16.msra.mxu0 0
        %1855 = vmatprep.subr.bf16.mxu0 0
        %1856 = vmatpush1.bf16.msra.mxu0 0
        %1857 = vmatprep.subr.bf16.mxu0 0
        %1858 = vmatpush1.bf16.msra.mxu0 0
        %1859 = vmatprep.subr.bf16.mxu0 0
        %1860 = vmatpush1.bf16.msra.mxu0 0
        %1861 = vmatprep.subr.bf16.mxu0 0
        %1862 = vmatpush1.bf16.msra.mxu0 0
        %1863 = vmatprep.subr.bf16.mxu0 0
        %1864 = vmatpush1.bf16.msra.mxu0 0
        %1865 = vmatprep.subr.bf16.mxu0 0
        %1866 = vmatpush1.bf16.msra.mxu0 0
        %1867 = vmatprep.subr.bf16.mxu0 0
        %1868 = vmatpush1.bf16.msra.mxu0 0
        %1869 = vmatprep.subr.bf16.mxu0 0
        %1870 = vmatpush1.bf16.msra.mxu0 0
        %1871 = vmatprep.subr.bf16.mxu0 0
        %1872 = vmatpush1.bf16.msra.mxu0 0
        %1873 = vmatprep.subr.bf16.mxu0 0
        %1874 = vmatpush1.bf16.msra.mxu0 0
        %1875 = vmatprep.subr.bf16.mxu0 0
        %1876 = vmatpush1.bf16.msra.mxu0 0
        %1877 = vmatprep.mubr.bf16.mxu0 0
        %1878 = vmatmul.mubr.bf16.gmra.mrb[0].mxu0 %v1834
        %v1879 = vpop.f32.mrb[0].mxu0
        %v1880 = vadd.f32 0.0, %v1879
        %v1881 = vpop.f32.mrb[0].mxu0
        %v1882 = vpop.f32.mrb[0].mxu0
        %v1883 = vadd.f32 0.0, %v1882
        %v1884 = vpop.f32.mrb[0].mxu0
        %1885 = vmatprep.mubr.bf16.mxu0 0
        %1886 = vmatmul.mubr.bf16.gmra.mrb[0].mxu0 %v1837
        %v1887 = vpop.f32.mrb[0].mxu0
        %v1888 = vadd.f32 0.0, %v1887
        %v1889 = vpop.f32.mrb[0].mxu0
        %v1890 = vpop.f32.mrb[0].mxu0
        %v1891 = vadd.f32 0.0, %v1890
        %v1892 = vpop.f32.mrb[0].mxu0
        %1893 = vmatprep.mubr.bf16.mxu0 0
        %1894 = vmatmul.mubr.bf16.gmra.mrb[0].mxu0 %v1840
        %v1895 = vpop.f32.mrb[0].mxu0
        %v1896 = vadd.f32 0.0, %v1895
        %v1897 = vpop.f32.mrb[0].mxu0
        %v1898 = vpop.f32.mrb[0].mxu0
        %v1899 = vadd.f32 0.0, %v1898
        %v1900 = vpop.f32.mrb[0].mxu0
        %1901 = vmatprep.mubr.bf16.mxu0 0
        %1902 = vmatmul.mubr.bf16.gmra.mrb[0].mxu0 %v1843
        %v1903 = vpop.f32.mrb[0].mxu0
        %v1904 = vadd.f32 0.0, %v1903
        %v1905 = vpop.f32.mrb[0].mxu0
        %v1906 = vpop.f32.mrb[0].mxu0
        %v1907 = vadd.f32 0.0, %v1906
        %v1908 = vpop.f32.mrb[0].mxu0
        %1909 = vdwg.mxu0
        %v1911 = vsel %vm1102, %v1675, 0
        %v1914 = vsel %vm1102, %v1676, 0
        %v1917 = vsel %vm1102, %v1677, 0
        %v1920 = vsel %vm1102, %v1678, 0
        %1922 = vmatprep.subr.bf16.mxu0 0
        %1923 = vmatpush1.bf16.msra.mxu0 %v1659
        %1924 = vmatprep.subr.bf16.mxu0 0
        %1925 = vmatpush1.bf16.msra.mxu0 %v1660
        %1926 = vmatprep.subr.bf16.mxu0 0
        %1927 = vmatpush1.bf16.msra.mxu0 %v1661
        %1928 = vmatprep.subr.bf16.mxu0 0
        %1929 = vmatpush1.bf16.msra.mxu0 %v1662
        %1930 = vmatprep.subr.bf16.mxu0 0
        %1931 = vmatpush1.bf16.msra.mxu0 0
        %1932 = vmatprep.subr.bf16.mxu0 0
        %1933 = vmatpush1.bf16.msra.mxu0 0
        %1934 = vmatprep.subr.bf16.mxu0 0
        %1935 = vmatpush1.bf16.msra.mxu0 0
        %1936 = vmatprep.subr.bf16.mxu0 0
        %1937 = vmatpush1.bf16.msra.mxu0 0
        %1938 = vmatprep.subr.bf16.mxu0 0
        %1939 = vmatpush1.bf16.msra.mxu0 0
        %1940 = vmatprep.subr.bf16.mxu0 0
        %1941 = vmatpush1.bf16.msra.mxu0 0
        %1942 = vmatprep.subr.bf16.mxu0 0
        %1943 = vmatpush1.bf16.msra.mxu0 0
        %1944 = vmatprep.subr.bf16.mxu0 0
        %1945 = vmatpush1.bf16.msra.mxu0 0
        %1946 = vmatprep.subr.bf16.mxu0 0
        %1947 = vmatpush1.bf16.msra.mxu0 0
        %1948 = vmatprep.subr.bf16.mxu0 0
        %1949 = vmatpush1.bf16.msra.mxu0 0
        %1950 = vmatprep.subr.bf16.mxu0 0
        %1951 = vmatpush1.bf16.msra.mxu0 0
        %1952 = vmatprep.subr.bf16.mxu0 0
        %1953 = vmatpush1.bf16.msra.mxu0 0
        %1954 = vmatprep.mubr.bf16.mxu0 0
        %1955 = vmatmul.mubr.bf16.gmra.mrb[0].mxu0 %v1911
        %v1956 = vpop.f32.mrb[0].mxu0
        %v1957 = vadd.f32 0.0, %v1956
        %v1958 = vpop.f32.mrb[0].mxu0
        %v1959 = vpop.f32.mrb[0].mxu0
        %v1960 = vadd.f32 0.0, %v1959
        %v1961 = vpop.f32.mrb[0].mxu0
        %1962 = vmatprep.mubr.bf16.mxu0 0
        %1963 = vmatmul.mubr.bf16.gmra.mrb[0].mxu0 %v1914
        %v1964 = vpop.f32.mrb[0].mxu0
        %v1965 = vadd.f32 0.0, %v1964
        %v1966 = vpop.f32.mrb[0].mxu0
        %v1967 = vpop.f32.mrb[0].mxu0
        %v1968 = vadd.f32 0.0, %v1967
        %v1969 = vpop.f32.mrb[0].mxu0
        %1970 = vmatprep.mubr.bf16.mxu0 0
        %1971 = vmatmul.mubr.bf16.gmra.mrb[0].mxu0 %v1917
        %v1972 = vpop.f32.mrb[0].mxu0
        %v1973 = vadd.f32 0.0, %v1972
        %v1974 = vpop.f32.mrb[0].mxu0
        %v1975 = vpop.f32.mrb[0].mxu0
        %v1976 = vadd.f32 0.0, %v1975
        %v1977 = vpop.f32.mrb[0].mxu0
        %1978 = vmatprep.mubr.bf16.mxu0 0
        %1979 = vmatmul.mubr.bf16.gmra.mrb[0].mxu0 %v1920
        %v1980 = vpop.f32.mrb[0].mxu0
        %v1981 = vadd.f32 0.0, %v1980
        %v1982 = vpop.f32.mrb[0].mxu0
        %v1983 = vpop.f32.mrb[0].mxu0
        %v1984 = vadd.f32 0.0, %v1983
        %v1985 = vpop.f32.mrb[0].mxu0
        %1986 = vdwg.mxu0
        %v1987 = vpack.c.bf16 %v1729, %v1726
        %v1988 = vpack.c.bf16 %v1737, %v1734
        %v1989 = vpack.c.bf16 %v1745, %v1742
        %v1990 = vpack.c.bf16 %v1753, %v1750
        %v1991 = vpack.c.bf16 %v1806, %v1803
        %v1992 = vpack.c.bf16 %v1814, %v1811
        %v1993 = vpack.c.bf16 %v1822, %v1819
        %v1994 = vpack.c.bf16 %v1830, %v1827
        %v1995 = vpack.c.bf16 %v1883, %v1880
        %v1996 = vpack.c.bf16 %v1891, %v1888
        %v1997 = vpack.c.bf16 %v1899, %v1896
        %v1998 = vpack.c.bf16 %v1907, %v1904
        %v1999 = vpack.c.bf16 %v1960, %v1957
        %v2000 = vpack.c.bf16 %v1968, %v1965
        %v2001 = vpack.c.bf16 %v1976, %v1973
        %v2002 = vpack.c.bf16 %v1984, %v1981
        %v2003 = vld [vmem:[%s3] sm:$0xf]
        %v2004 = vld [vmem:[%s3 + $0x4] sm:$0xf]
        %v2005 = vld [vmem:[%s3 + $0x8] sm:$0xf]
        %v2006 = vld [vmem:[%s3 + $0xc] sm:$0xf]
        %v2007 = vld [vmem:[%s3 + $0x10] sm:$0xf]
        %v2008 = vld [vmem:[%s3 + $0x14] sm:$0xf]
        %v2009 = vld [vmem:[%s3 + $0x18] sm:$0xf]
        %v2010 = vld [vmem:[%s3 + $0x1c] sm:$0xf]
        %v2011 = vld [vmem:[%s3 + $0x20] sm:$0xf]
        %v2012 = vld [vmem:[%s3 + $0x24] sm:$0xf]
        %v2013 = vld [vmem:[%s3 + $0x28] sm:$0xf]
        %v2014 = vld [vmem:[%s3 + $0x2c] sm:$0xf]
        %v2015 = vld [vmem:[%s3 + $0x30] sm:$0xf]
        %v2016 = vld [vmem:[%s3 + $0x34] sm:$0xf]
        %v2017 = vld [vmem:[%s3 + $0x38] sm:$0xf]
        %v2018 = vld [vmem:[%s3 + $0x3c] sm:$0xf]
        %v2019 = vld [vmem:[%s4] sm:$0x1]
        %v2021 = vlaneseq
        %v2022 = vshrl.u32 %v2021, 7
        %v2023 = vsub.s32 0, %v2022
        %v2024 = vrot.slane %v2019, %v2023
        %v2042 = vunpack.c.l.b16 %v2003
        %v2043 = vunpack.c.l.b16 %v2004
        %v2044 = vunpack.c.l.b16 %v2005
        %v2045 = vunpack.c.l.b16 %v2006
        %v2046 = vunpack.c.l.b16 %v2007
        %v2047 = vunpack.c.l.b16 %v2008
        %v2048 = vunpack.c.l.b16 %v2009
        %v2049 = vunpack.c.l.b16 %v2010
        %v2050 = vunpack.c.l.b16 %v2011
        %v2051 = vunpack.c.l.b16 %v2012
        %v2052 = vunpack.c.l.b16 %v2013
        %v2053 = vunpack.c.l.b16 %v2014
        %v2054 = vunpack.c.l.b16 %v2015
        %v2055 = vunpack.c.l.b16 %v2016
        %v2056 = vunpack.c.l.b16 %v2017
        %v2057 = vunpack.c.l.b16 %v2018
        %v2058 = vpack.c.b16 %v2043, %v2042
        %v2059 = vpack.c.b16 %v2045, %v2044
        %v2060 = vpack.c.b16 %v2047, %v2046
        %v2061 = vpack.c.b16 %v2049, %v2048
        %v2062 = vpack.c.b16 %v2051, %v2050
        %v2063 = vpack.c.b16 %v2053, %v2052
        %v2064 = vpack.c.b16 %v2055, %v2054
        %v2065 = vpack.c.b16 %v2057, %v2056
        %2074 = vmatprep.subr.bf16.mxu0 0
        %2075 = vmatpush1.bf16.msra.mxu0 %v2058
        %2076 = vmatprep.subr.bf16.mxu0 0
        %2077 = vmatpush1.bf16.msra.mxu0 %v2059
        %2078 = vmatprep.subr.bf16.mxu0 0
        %2079 = vmatpush1.bf16.msra.mxu0 %v2060
        %2080 = vmatprep.subr.bf16.mxu0 0
        %2081 = vmatpush1.bf16.msra.mxu0 %v2061
        %2082 = vmatprep.subr.bf16.mxu0 0
        %2083 = vmatpush1.bf16.msra.mxu0 %v2062
        %2084 = vmatprep.subr.bf16.mxu0 0
        %2085 = vmatpush1.bf16.msra.mxu0 %v2063
        %2086 = vmatprep.subr.bf16.mxu0 0
        %2087 = vmatpush1.bf16.msra.mxu0 %v2064
        %2088 = vmatprep.subr.bf16.mxu0 0
        %2089 = vmatpush1.bf16.msra.mxu0 %v2065
        %2090 = vmatprep.subr.bf16.mxu0 0
        %2091 = vmatpush1.bf16.msra.mxu0 0
        %2092 = vmatprep.subr.bf16.mxu0 0
        %2093 = vmatpush1.bf16.msra.mxu0 0
        %2094 = vmatprep.subr.bf16.mxu0 0
        %2095 = vmatpush1.bf16.msra.mxu0 0
        %2096 = vmatprep.subr.bf16.mxu0 0
        %2097 = vmatpush1.bf16.msra.mxu0 0
        %2098 = vmatprep.subr.bf16.mxu0 0
        %2099 = vmatpush1.bf16.msra.mxu0 0
        %2100 = vmatprep.subr.bf16.mxu0 0
        %2101 = vmatpush1.bf16.msra.mxu0 0
        %2102 = vmatprep.subr.bf16.mxu0 0
        %2103 = vmatpush1.bf16.msra.mxu0 0
        %2104 = vmatprep.subr.bf16.mxu0 0
        %2105 = vmatpush1.bf16.msra.mxu0 0
        %2106 = vmatprep.mubr.bf16.mxu0 0
        %2107 = vmatmul.mubr.bf16.gmra.mrb[0].mxu0 %v1987
        %v2108 = vpop.f32.mrb[0].mxu0
        %v2109 = vadd.f32 %v2024, %v2108
        %v2110 = vpop.f32.mrb[0].mxu0
        %v2111 = vpop.f32.mrb[0].mxu0
        %v2112 = vadd.f32 %v2024, %v2111
        %v2113 = vpop.f32.mrb[0].mxu0
        %2114 = vmatprep.mubr.bf16.mxu0 0
        %2115 = vmatmul.mubr.bf16.gmra.mrb[0].mxu0 %v1988
        %v2116 = vpop.f32.mrb[0].mxu0
        %v2117 = vadd.f32 %v2024, %v2116
        %v2118 = vpop.f32.mrb[0].mxu0
        %v2119 = vpop.f32.mrb[0].mxu0
        %v2120 = vadd.f32 %v2024, %v2119
        %v2121 = vpop.f32.mrb[0].mxu0
        %2122 = vmatprep.mubr.bf16.mxu0 0
        %2123 = vmatmul.mubr.bf16.gmra.mrb[0].mxu0 %v1989
        %v2124 = vpop.f32.mrb[0].mxu0
        %v2125 = vadd.f32 %v2024, %v2124
        %v2126 = vpop.f32.mrb[0].mxu0
        %v2127 = vpop.f32.mrb[0].mxu0
        %v2128 = vadd.f32 %v2024, %v2127
        %v2129 = vpop.f32.mrb[0].mxu0
        %2130 = vmatprep.mubr.bf16.mxu0 0
        %2131 = vmatmul.mubr.bf16.gmra.mrb[0].mxu0 %v1990
        %v2132 = vpop.f32.mrb[0].mxu0
        %v2133 = vadd.f32 %v2024, %v2132
        %v2134 = vpop.f32.mrb[0].mxu0
        %v2135 = vpop.f32.mrb[0].mxu0
        %v2136 = vadd.f32 %v2024, %v2135
        %v2137 = vpop.f32.mrb[0].mxu0
        %2138 = vmatprep.mubr.bf16.mxu0 0
        %2139 = vmatmul.mubr.bf16.gmra.mrb[0].mxu0 %v1991
        %v2140 = vpop.f32.mrb[0].mxu0
        %v2141 = vadd.f32 %v2024, %v2140
        %v2142 = vpop.f32.mrb[0].mxu0
        %v2143 = vpop.f32.mrb[0].mxu0
        %v2144 = vadd.f32 %v2024, %v2143
        %v2145 = vpop.f32.mrb[0].mxu0
        %2146 = vmatprep.mubr.bf16.mxu0 0
        %2147 = vmatmul.mubr.bf16.gmra.mrb[0].mxu0 %v1992
        %v2148 = vpop.f32.mrb[0].mxu0
        %v2149 = vadd.f32 %v2024, %v2148
        %v2150 = vpop.f32.mrb[0].mxu0
        %v2151 = vpop.f32.mrb[0].mxu0
        %v2152 = vadd.f32 %v2024, %v2151
        %v2153 = vpop.f32.mrb[0].mxu0
        %2154 = vmatprep.mubr.bf16.mxu0 0
        %2155 = vmatmul.mubr.bf16.gmra.mrb[0].mxu0 %v1993
        %v2156 = vpop.f32.mrb[0].mxu0
        %v2157 = vadd.f32 %v2024, %v2156
        %v2158 = vpop.f32.mrb[0].mxu0
        %v2159 = vpop.f32.mrb[0].mxu0
        %v2160 = vadd.f32 %v2024, %v2159
        %v2161 = vpop.f32.mrb[0].mxu0
        %2162 = vmatprep.mubr.bf16.mxu0 0
        %2163 = vmatmul.mubr.bf16.gmra.mrb[0].mxu0 %v1994
        %v2164 = vpop.f32.mrb[0].mxu0
        %v2165 = vadd.f32 %v2024, %v2164
        %v2166 = vpop.f32.mrb[0].mxu0
        %v2167 = vpop.f32.mrb[0].mxu0
        %v2168 = vadd.f32 %v2024, %v2167
        %v2169 = vpop.f32.mrb[0].mxu0
        %2170 = vmatprep.mubr.bf16.mxu0 0
        %2171 = vmatmul.mubr.bf16.gmra.mrb[0].mxu0 %v1995
        %v2172 = vpop.f32.mrb[0].mxu0
        %v2173 = vadd.f32 %v2024, %v2172
        %v2174 = vpop.f32.mrb[0].mxu0
        %v2175 = vpop.f32.mrb[0].mxu0
        %v2176 = vadd.f32 %v2024, %v2175
        %v2177 = vpop.f32.mrb[0].mxu0
        %2178 = vmatprep.mubr.bf16.mxu0 0
        %2179 = vmatmul.mubr.bf16.gmra.mrb[0].mxu0 %v1996
        %v2180 = vpop.f32.mrb[0].mxu0
        %v2181 = vadd.f32 %v2024, %v2180
        %v2182 = vpop.f32.mrb[0].mxu0
        %v2183 = vpop.f32.mrb[0].mxu0
        %v2184 = vadd.f32 %v2024, %v2183
        %v2185 = vpop.f32.mrb[0].mxu0
        %2186 = vmatprep.mubr.bf16.mxu0 0
        %2187 = vmatmul.mubr.bf16.gmra.mrb[0].mxu0 %v1997
        %v2188 = vpop.f32.mrb[0].mxu0
        %v2189 = vadd.f32 %v2024, %v2188
        %v2190 = vpop.f32.mrb[0].mxu0
        %v2191 = vpop.f32.mrb[0].mxu0
        %v2192 = vadd.f32 %v2024, %v2191
        %v2193 = vpop.f32.mrb[0].mxu0
        %2194 = vmatprep.mubr.bf16.mxu0 0
        %2195 = vmatmul.mubr.bf16.gmra.mrb[0].mxu0 %v1998
        %v2196 = vpop.f32.mrb[0].mxu0
        %v2197 = vadd.f32 %v2024, %v2196
        %v2198 = vpop.f32.mrb[0].mxu0
        %v2199 = vpop.f32.mrb[0].mxu0
        %v2200 = vadd.f32 %v2024, %v2199
        %v2201 = vpop.f32.mrb[0].mxu0
        %2202 = vmatprep.mubr.bf16.mxu0 0
        %2203 = vmatmul.mubr.bf16.gmra.mrb[0].mxu0 %v1999
        %v2204 = vpop.f32.mrb[0].mxu0
        %v2205 = vadd.f32 %v2024, %v2204
        %v2206 = vpop.f32.mrb[0].mxu0
        %v2207 = vpop.f32.mrb[0].mxu0
        %v2208 = vadd.f32 %v2024, %v2207
        %v2209 = vpop.f32.mrb[0].mxu0
        %2210 = vmatprep.mubr.bf16.mxu0 0
        %2211 = vmatmul.mubr.bf16.gmra.mrb[0].mxu0 %v2000
        %v2212 = vpop.f32.mrb[0].mxu0
        %v2213 = vadd.f32 %v2024, %v2212
        %v2214 = vpop.f32.mrb[0].mxu0
        %v2215 = vpop.f32.mrb[0].mxu0
        %v2216 = vadd.f32 %v2024, %v2215
        %v2217 = vpop.f32.mrb[0].mxu0
        %2218 = vmatprep.mubr.bf16.mxu0 0
        %2219 = vmatmul.mubr.bf16.gmra.mrb[0].mxu0 %v2001
        %v2220 = vpop.f32.mrb[0].mxu0
        %v2221 = vadd.f32 %v2024, %v2220
        %v2222 = vpop.f32.mrb[0].mxu0
        %v2223 = vpop.f32.mrb[0].mxu0
        %v2224 = vadd.f32 %v2024, %v2223
        %v2225 = vpop.f32.mrb[0].mxu0
        %2226 = vmatprep.mubr.bf16.mxu0 0
        %2227 = vmatmul.mubr.bf16.gmra.mrb[0].mxu0 %v2002
        %v2228 = vpop.f32.mrb[0].mxu0
        %v2229 = vadd.f32 %v2024, %v2228
        %v2230 = vpop.f32.mrb[0].mxu0
        %v2231 = vpop.f32.mrb[0].mxu0
        %v2232 = vadd.f32 %v2024, %v2231
        %v2233 = vpop.f32.mrb[0].mxu0
        %2234 = vdwg.mxu0
        %2235 = vst [vmem:[%s220] sm:$0xff] %v2109
        %2236 = vst [vmem:[%s220 + $0x8] sm:$0xff] %v2112
        %2237 = vst [vmem:[%s220 + $0x10] sm:$0xff] %v2117
        %2238 = vst [vmem:[%s220 + $0x18] sm:$0xff] %v2120
        %2239 = vst [vmem:[%s220 + $0x20] sm:$0xff] %v2125
        %2240 = vst [vmem:[%s220 + $0x28] sm:$0xff] %v2128
        %2241 = vst [vmem:[%s220 + $0x30] sm:$0xff] %v2133
        %2242 = vst [vmem:[%s220 + $0x38] sm:$0xff] %v2136
        %2243 = vst [vmem:[%s220 + $0x40] sm:$0xff] %v2141
        %2244 = vst [vmem:[%s220 + $0x48] sm:$0xff] %v2144
        %2245 = vst [vmem:[%s220 + $0x50] sm:$0xff] %v2149
        %2246 = vst [vmem:[%s220 + $0x58] sm:$0xff] %v2152
        %2247 = vst [vmem:[%s220 + $0x60] sm:$0xff] %v2157
        %2248 = vst [vmem:[%s220 + $0x68] sm:$0xff] %v2160
        %2249 = vst [vmem:[%s220 + $0x70] sm:$0xff] %v2165
        %2250 = vst [vmem:[%s220 + $0x78] sm:$0xff] %v2168
        %2251 = vst [vmem:[%s220 + $0x80] sm:$0xff] %v2173
        %2252 = vst [vmem:[%s220 + $0x88] sm:$0xff] %v2176
        %2253 = vst [vmem:[%s220 + $0x90] sm:$0xff] %v2181
        %2254 = vst [vmem:[%s220 + $0x98] sm:$0xff] %v2184
        %2255 = vst [vmem:[%s220 + $0xa0] sm:$0xff] %v2189
        %2256 = vst [vmem:[%s220 + $0xa8] sm:$0xff] %v2192
        %2257 = vst [vmem:[%s220 + $0xb0] sm:$0xff] %v2197
        %2258 = vst [vmem:[%s220 + $0xb8] sm:$0xff] %v2200
        %2259 = vst [vmem:[%s220 + $0xc0] sm:$0xff] %v2205
        %2260 = vst [vmem:[%s220 + $0xc8] sm:$0xff] %v2208
        %2261 = vst [vmem:[%s220 + $0xd0] sm:$0xff] %v2213
        %2262 = vst [vmem:[%s220 + $0xd8] sm:$0xff] %v2216
        %2263 = vst [vmem:[%s220 + $0xe0] sm:$0xff] %v2221
        %2264 = vst [vmem:[%s220 + $0xe8] sm:$0xff] %v2224
        %2265 = vst [vmem:[%s220 + $0xf0] sm:$0xff] %v2229
        %2266 = vst [vmem:[%s220 + $0xf8] sm:$0xff] %v2232
        %s2267 = sand.u32 %s137, 1
        %s2268 = scalar_lea.sflag [#allocation3], %s2267
        %s2269 = sand.u32 %s137, 1
        %s2270 = smul.addr %s2269, 256
        %s2271 = scalar_lea.vmem [#allocation2], %s2270
        // Predicated region
        $region41: #{tpu_custom_call.1} parent=39 // pred_check
          %p2272 = pneg %p147
        $region42: #{tpu_custom_call.1} parent=39 // pred_check_branch
          %2274 = sbr.rel (%p2272) target = $region44
        $region43: #{tpu_custom_call.1} parent=39 // pred_region
          %s2275 = smul.u32 32, %s19
          %s2277 = ssub.s32 4096, 4096
          %2278 = vsyncadd %s2268, %s2277
          %s2279 = smul.addr %s2275, 128
          %s2280 = scalar_lea.hbm %s5, %s2279
          %s2281 = sshll.u32 %s2271, 4
          %s2282 = int_to_ptr.vmem [resolvable:$true] %s2281
          %2287 = dma.vmem_to_hbm [thread:$0]  %s2282, 4096, %s2280, %s2268, 128, 128, 8
        $region44: #{tpu_custom_call.1} parent=39 // pred_fallthru
          _
      $region40: #{tpu_custom_call.1} parent=5 // pred_fallthru
        _
      %p2288 = scmp.le.s32.totalorder 2, %s14
      // Predicated region
      $region45: #{tpu_custom_call.1} parent=5 // pred_check
        %p2289 = pneg %p2288
      $region46: #{tpu_custom_call.1} parent=5 // pred_check_branch
        %2291 = sbr.rel (%p2289) target = $region48
      $region47: #{tpu_custom_call.1} parent=5 // pred_region
        %s2292 = ssub.s32 %s14, 2
        // Predicated region
        $region49: #{tpu_custom_call.1} parent=47 // pred_check
          %p2293 = pneg %p153
        $region50: #{tpu_custom_call.1} parent=47 // pred_check_branch
          %2295 = sbr.rel (%p2293) target = $region52
        $region51: #{tpu_custom_call.1} parent=47 // pred_region
          %s2296 = sand.u32 %s138, 1
          %s2297 = scalar_lea.sflag [#allocation3], %s2296
          %s2298 = sand.u32 %s138, 1
          %s2299 = smul.addr %s2298, 256
          %s2300 = scalar_lea.vmem [#allocation2], %s2299
          %2301 = dma.done %s2297, 4096
        $region52: #{tpu_custom_call.1} parent=47 // pred_fallthru
          _
      $region48: #{tpu_custom_call.1} parent=5 // pred_fallthru
        _
    $region6: #{tpu_custom_call.1} parent=1 // loop_footer
      %s18 = sadd.s32 1, %s14
    $region7: #{tpu_custom_call.1} parent=1 // loop_footer_branch
      %13 = sbr.rel target = $region3
    $region8: #{tpu_custom_call.1} parent=1 // loop_exit
      _
    %2302 = vsyncpa [#allocation3], 1
    %s2303 = scalar_lea.sflag [#allocation3], 1
    %2304 = vsyncpa %s2303, 1

</llo_original>
